<compile_context>
chip_gen: v6e
topology: v6e:2x2x1
jax: 0.10.0
libtpu: 0.0.40
codegen_flags: <defaults>
</compile_context>

<pallas_src>
import functools
import math

import jax
import jax.numpy as jnp
from jax.experimental import pallas as pl
from jax.experimental.pallas import tpu as pltpu

LANE = 128


def _round_up(x, m):
    return (x + m - 1) // m * m


# ----------------------------------------------------------------------------
# Kernel 1: 3x3 "valid" conv as im2col matmul + bias + ReLU (backbone stem)
#   bf16 operands -> MXU f32 accumulate -> f32 bias + ReLU -> bf16 lane-dense
#   NHWC output.
# ----------------------------------------------------------------------------
def _conv_mm_kernel(p_ref, w_ref, b_ref, o_ref):
    acc = jnp.dot(p_ref[...], w_ref[...], preferred_element_type=jnp.float32)
    o_ref[...] = jnp.maximum(acc + b_ref[...], 0.0).astype(o_ref.dtype)


def conv3x3_relu_valid(xh, w, b, *, tile_m=1024):
    """xh: [B, H+2, W+2, Cin] NHWC (halo rows/cols included), w: [Cout,Cin,3,3],
    b: [Cout].  Returns ReLU(valid 3x3 conv) as NHWC bf16 [B, H, W, Cout]."""
    B, Hh, Wh, Cin = xh.shape
    H, W = Hh - 2, Wh - 2
    Cout = w.shape[0]
    Cout_pad = _round_up(Cout, LANE)
    K = 9 * Cin
    M = B * H * W

    # im2col built entirely in bf16 (9 static shifts of the halo'd window).
    # TODO(synk): when the full feature map is needed (real FPN/RPN path), tile
    # over (batch, row-blocks) and build the 9 shifted views in-kernel from a
    # VMEM halo window instead of materializing the im2col slab in HBM.
    xh = xh.astype(jnp.bfloat16)
    cols = [xh[:, dy:dy + H, dx:dx + W, :] for dy in range(3) for dx in range(3)]
    p = jnp.concatenate(cols, axis=-1).reshape(M, K)                 # bf16 slab

    # weights: [Cout, Cin, 3, 3] -> [K=(dy,dx,cin), Cout], zero-pad Cout to a lane.
    w_mat = w.transpose(2, 3, 1, 0).reshape(K, Cout)
    w_mat = jnp.pad(w_mat, ((0, 0), (0, Cout_pad - Cout))).astype(jnp.bfloat16)
    b_row = jnp.pad(b.reshape(1, Cout),
                    ((0, 0), (0, Cout_pad - Cout))).astype(jnp.float32)

    # padded cdiv grid; always >= 2 steps so "parallel" uses both v7x TensorCores.
    tile_m = min(tile_m, max(8, _round_up(pl.cdiv(M, 2), 8)))
    M_pad = _round_up(M, tile_m)
    if M_pad != M:
        p = jnp.pad(p, ((0, M_pad - M), (0, 0)))

    cost = pl.CostEstimate(
        flops=2 * M_pad * K * Cout_pad,
        transcendentals=0,
        bytes_accessed=(M_pad * K + K * Cout_pad + M_pad * Cout_pad) * 2
                       + Cout_pad * 4)

    out = pl.pallas_call(
        _conv_mm_kernel,
        out_shape=jax.ShapeDtypeStruct((M_pad, Cout_pad), jnp.bfloat16),
        grid_spec=pltpu.PrefetchScalarGridSpec(
            num_scalar_prefetch=0,
            grid=(M_pad // tile_m,),
            in_specs=[
                pl.BlockSpec((tile_m, K), lambda i: (i, 0)),
                pl.BlockSpec((K, Cout_pad), lambda i: (0, 0)),
                pl.BlockSpec((1, Cout_pad), lambda i: (0, 0)),
            ],
            out_specs=pl.BlockSpec((tile_m, Cout_pad), lambda i: (i, 0)),
        ),
        compiler_params=pltpu.CompilerParams(dimension_semantics=("parallel",)),
        cost_estimate=cost,
    )(p, w_mat, b_row)

    # NHWC bf16 output; no NCHW transpose anywhere downstream.
    return out[:M, :Cout].reshape(B, H, W, Cout)


# ----------------------------------------------------------------------------
# Kernel 2: fused RoI box head (TwoMLPHead) + FastRCNNPredictor
#   fc6 tiled over K with an f32 accumulator; on the last K step:
#   ReLU -> fc7 -> ReLU -> fused (cls|bbox) head matmul -> softmax over the
#   class lanes (f32 math, EUP reciprocal); deltas passed through raw.
# ----------------------------------------------------------------------------
def _roi_head_kernel(x_ref, w6_ref, b6_ref, w7_ref, b7_ref, wh_ref, bh_ref,
                     out_ref, acc_ref, *, num_classes):
    k = pl.program_id(1)

    @pl.when(k == 0)
    def _():
        acc_ref[...] = jnp.zeros_like(acc_ref)

    acc_ref[...] += jnp.dot(x_ref[...], w6_ref[...],
                            preferred_element_type=jnp.float32)

    @pl.when(k == pl.num_programs(1) - 1)
    def _():
        h = jnp.maximum(acc_ref[...] + b6_ref[...], 0.0)
        h = jnp.dot(h.astype(jnp.bfloat16), w7_ref[...],
                    preferred_element_type=jnp.float32)
        h = jnp.maximum(h + b7_ref[...], 0.0)
        head = jnp.dot(h.astype(jnp.bfloat16), wh_ref[...],
                       preferred_element_type=jnp.float32) + bh_ref[...]

        # softmax over the first `num_classes` lanes only (class logits);
        # remaining lanes carry bbox deltas (+ zero padding) untouched.
        lane = jax.lax.broadcasted_iota(jnp.int32, head.shape, dimension=1)
        is_cls = lane < num_classes
        logits = jnp.where(is_cls, head, jnp.float32(-1e30))
        m = jnp.max(logits, axis=-1, keepdims=True)
        e = jnp.where(is_cls, jnp.exp(logits - m), 0.0)
        denom = jnp.sum(e, axis=-1, keepdims=True)
        probs = e * pl.reciprocal(denom, approx=True)
        out_ref[...] = jnp.where(is_cls, probs, head)


def roi_head(x, w6, b6, w7, b7, wc, bc, wb, bb, *, num_classes,
             tile_r=128, tile_k=512):
    R, feat_dim = x.shape
    hidden = w6.shape[1]
    head_n = wc.shape[1] + wb.shape[1]                  # num_classes + 4*num_classes
    head_pad = _round_up(head_n, LANE)

    # fuse cls_score + bbox_pred into a single lane-dense head matmul
    w_head = jnp.pad(jnp.concatenate([wc, wb], axis=1),
                     ((0, 0), (0, head_pad - head_n))).astype(jnp.bfloat16)
    b_head = jnp.pad(jnp.concatenate([bc, bb], axis=1),
                     ((0, 0), (0, head_pad - head_n))).astype(jnp.float32)

    tile_r = min(tile_r, _round_up(R, 8))
    R_pad = _round_up(R, tile_r)
    tile_k = min(tile_k, _round_up(feat_dim, LANE))     # keep fc6 w-block VMEM-sized
    K_pad = _round_up(feat_dim, tile_k)
    n_k = K_pad // tile_k

    x_p = jnp.pad(x.astype(jnp.bfloat16),
                  ((0, R_pad - R), (0, K_pad - feat_dim)))
    w6_p = jnp.pad(w6, ((0, K_pad - feat_dim), (0, 0))).astype(jnp.bfloat16)
    w7_bf = w7.astype(jnp.bfloat16)

    cost = pl.CostEstimate(
        flops=2 * R_pad * (K_pad * hidden + hidden * hidden + hidden * head_pad),
        transcendentals=R_pad * head_pad,
        bytes_accessed=(R_pad * K_pad + K_pad * hidden + hidden * hidden
                        + hidden * head_pad) * 2
                       + (2 * hidden + head_pad + R_pad * head_pad) * 4)

    kernel = functools.partial(_roi_head_kernel, num_classes=num_classes)
    out = pl.pallas_call(
        kernel,
        out_shape=jax.ShapeDtypeStruct((R_pad, head_pad), jnp.float32),
        grid_spec=pltpu.PrefetchScalarGridSpec(
            num_scalar_prefetch=0,
            grid=(R_pad // tile_r, n_k),
            in_specs=[
                pl.BlockSpec((tile_r, tile_k), lambda i, k: (i, k)),
                pl.BlockSpec((tile_k, hidden), lambda i, k: (k, 0)),
                pl.BlockSpec((1, hidden), lambda i, k: (0, 0)),
                pl.BlockSpec((hidden, hidden), lambda i, k: (0, 0)),
                pl.BlockSpec((1, hidden), lambda i, k: (0, 0)),
                pl.BlockSpec((hidden, head_pad), lambda i, k: (0, 0)),
                pl.BlockSpec((1, head_pad), lambda i, k: (0, 0)),
            ],
            out_specs=pl.BlockSpec((tile_r, head_pad), lambda i, k: (i, 0)),
            scratch_shapes=[pltpu.VMEM((tile_r, hidden), jnp.float32)],
        ),
        compiler_params=pltpu.CompilerParams(
            dimension_semantics=("parallel", "arbitrary")),
        cost_estimate=cost,
    )(x_p, w6_p, b6.astype(jnp.float32), w7_bf, b7.astype(jnp.float32),
      w_head, b_head)

    scores = out[:R, :num_classes]                      # softmax class probs
    deltas = out[:R, num_classes:head_n]                # raw bbox deltas
    return scores, deltas


# ----------------------------------------------------------------------------
# Box decoding glue (torchvision BoxCoder, weights (10, 10, 5, 5))
# ----------------------------------------------------------------------------
def decode_boxes(proposals, deltas, image_size):
    wx, wy, ww, wh = 10.0, 10.0, 5.0, 5.0
    widths = proposals[:, 2] - proposals[:, 0]
    heights = proposals[:, 3] - proposals[:, 1]
    ctr_x = proposals[:, 0] + 0.5 * widths
    ctr_y = proposals[:, 1] + 0.5 * heights
    dx, dy = deltas[:, 0] / wx, deltas[:, 1] / wy
    dw = jnp.minimum(deltas[:, 2] / ww, math.log(1000.0 / 16))
    dh = jnp.minimum(deltas[:, 3] / wh, math.log(1000.0 / 16))
    pcx, pcy = dx * widths + ctr_x, dy * heights + ctr_y
    pw, ph = jnp.exp(dw) * widths, jnp.exp(dh) * heights
    boxes = jnp.stack([pcx - 0.5 * pw, pcy - 0.5 * ph,
                       pcx + 0.5 * pw, pcy + 0.5 * ph], axis=-1)
    H, W = image_size
    lim = jnp.array([W, H, W, H], dtype=boxes.dtype)
    return jnp.clip(boxes, 0.0, lim)


# ----------------------------------------------------------------------------
# Functional forward (jitted once): stacked images -> (boxes, fg_scores)
# ----------------------------------------------------------------------------
def _rcnn_forward(params, x, *, num_classes, pool):
    B, _, H, W = x.shape
    p = pool
    y0, x0 = (H - p) // 2, (W - p) // 2

    # NHWC + bf16 once; pad by 1 (conv padding) and keep only the 9x9 receptive
    # field of the fixed 7x7 center crop — the rest of the feature map is never
    # read while the RPN/RoIAlign path is stubbed.
    # TODO(synk): ResNet50-FPN tower, RPN proposal generation, NMS and RoIAlign
    # have no clean Pallas equivalent here; fixed center proposal per image
    # (box_detections_per_img=1).  Revert to the full-feature-map conv when the
    # real tower lands.
    x_nhwc = x.astype(jnp.bfloat16).transpose(0, 2, 3, 1)
    xp = jnp.pad(x_nhwc, ((0, 0), (1, 1), (1, 1), (0, 0)))
    xh = xp[:, y0:y0 + p + 2, x0:x0 + p + 2, :]          # [B, p+2, p+2, Cin]

    crop = conv3x3_relu_valid(xh, params["conv_w"], params["conv_b"])  # [B,p,p,C]
    C = crop.shape[-1]
    # NHWC flatten: fc6 weight rows are laid out in (y, x, c) order.
    roi_feat = crop.reshape(B, p * p * C)

    scores, deltas = roi_head(
        roi_feat, params["w6"], params["b6"], params["w7"], params["b7"],
        params["wc"], params["bc"], params["wb"], params["bb"],
        num_classes=num_classes)

    proposals = jnp.tile(
        jnp.array([[x0, y0, x0 + p, y0 + p]], jnp.float32), (B, 1))
    # class 0 is background; keep the single foreground class (label 1)
    boxes = decode_boxes(proposals, deltas[:, 4:8], (H, W))          # [B, 4]
    fg_scores = scores[:, 1]                                         # [B]
    return boxes, fg_scores


# ----------------------------------------------------------------------------
# The RCNN module (eval-mode, no-grad forward by construction)
# ----------------------------------------------------------------------------
class RCNNPallas:
    def __init__(self, key, *, stem_channels=16, hidden=128, num_classes=2, pool=7):
        self.pool = pool
        self.num_classes = num_classes
        ks = jax.random.split(key, 10)
        s = 0.05
        feat_dim = stem_channels * pool * pool
        self.params = {
            "conv_w": s * jax.random.normal(ks[0], (stem_channels, 3, 3, 3), jnp.float32),
            "conv_b": s * jax.random.normal(ks[1], (stem_channels,), jnp.float32),
            "w6": s * jax.random.normal(ks[2], (feat_dim, hidden), jnp.float32),
            "b6": s * jax.random.normal(ks[3], (1, hidden), jnp.float32),
            "w7": s * jax.random.normal(ks[4], (hidden, hidden), jnp.float32),
            "b7": s * jax.random.normal(ks[5], (1, hidden), jnp.float32),
            # FastRCNNPredictor(in_features, 2): cls_score [hidden,2], bbox [hidden,8]
            "wc": s * jax.random.normal(ks[6], (hidden, num_classes), jnp.float32),
            "bc": s * jax.random.normal(ks[7], (1, num_classes), jnp.float32),
            "wb": s * jax.random.normal(ks[8], (hidden, num_classes * 4), jnp.float32),
            "bb": s * jax.random.normal(ks[9], (1, num_classes * 4), jnp.float32),
        }
        self._jit_forward = jax.jit(functools.partial(
            _rcnn_forward, num_classes=num_classes, pool=pool))

    def __call__(self, images):
        # matches torch forward contract: a list of [3, H, W] images
        x = jnp.stack([jnp.asarray(img, jnp.float32) for img in images], axis=0)
        boxes, fg_scores = self._jit_forward(self.params, x)

        preds = []
        for i in range(len(images)):
            preds.append({
                "boxes": boxes[i:i + 1],                    # [1, 4]
                "labels": jnp.ones((1,), jnp.int32),        # [1]
                "scores": fg_scores[i:i + 1],               # [1]
            })
        return preds


if __name__ == "__main__":
    key = jax.random.PRNGKey(0)
    k_model, k_img = jax.random.split(key)
    model = RCNNPallas(k_model)

    B, H, W = 2, 32, 32
    imgs = jax.random.uniform(k_img, (B, 3, H, W), jnp.float32)
    images = [imgs[i] for i in range(B)]   # list of [3, H, W], as in the torch forward

    preds = model(images)
    for d in preds:
        jax.block_until_ready(d["boxes"])
        jax.block_until_ready(d["scores"])
        jax.block_until_ready(d["labels"])

    assert preds[0]["boxes"].shape == (1, 4)
    assert preds[0]["scores"].shape == (1,)
    assert preds[0]["labels"].shape == (1,)
    assert bool(jnp.all(jnp.isfinite(preds[0]["boxes"])))
    print("KERNEL_OK")
</pallas_src>

<mosaic_0001>
module attributes {stable_mosaic.version = 11 : i64} {
  func.func @_conv_mm_kernel(%arg0: i32, %arg1: memref<56x27xbf16, #tpu.memory_space<vmem>>, %arg2: memref<27x128xbf16, #tpu.memory_space<vmem>>, %arg3: memref<1x128xf32, #tpu.memory_space<vmem>>, %arg4: memref<56x128xbf16, #tpu.memory_space<vmem>>) attributes {dimension_semantics = [#tpu.dimension_semantics<parallel>], iteration_bounds = array<i64: 2>, scalar_prefetch = 0 : i64, scratch_operands = 0 : i64, tpu.core_type = #tpu.core_type<tc>, window_params = [{transform_indices = @transform_0, window_bounds = array<i64: 56, 27>}, {pipeline_mode = #tpu.pipeline_mode<synchronous>, transform_indices = @transform_1, window_bounds = array<i64: 27, 128>}, {pipeline_mode = #tpu.pipeline_mode<synchronous>, transform_indices = @transform_2, window_bounds = array<i64: 1, 128>}, {transform_indices = @transform_3, window_bounds = array<i64: 56, 128>}]} {
    %c0 = arith.constant 0 : index
    %c0_0 = arith.constant 0 : index
    %0 = vector.load %arg1[%c0, %c0_0] : memref<56x27xbf16, #tpu.memory_space<vmem>>, vector<56x27xbf16>
    %c0_1 = arith.constant 0 : index
    %c0_2 = arith.constant 0 : index
    %1 = vector.load %arg2[%c0_1, %c0_2] : memref<27x128xbf16, #tpu.memory_space<vmem>>, vector<27x128xbf16>
    %cst = arith.constant dense<0.000000e+00> : vector<56x128xf32>
    %2 = tpu.matmul %0, %1, %cst {dimension_numbers = #tpu.dot_dimension_numbers<[1], [0], [0], [1], [0, 0, 1, 1], [], []>} : vector<56x27xbf16>, vector<27x128xbf16>, vector<56x128xf32> -> vector<56x128xf32>
    %c0_3 = arith.constant 0 : index
    %c0_4 = arith.constant 0 : index
    %3 = vector.load %arg3[%c0_3, %c0_4] : memref<1x128xf32, #tpu.memory_space<vmem>>, vector<1x128xf32>
    %4 = vector.broadcast %3 : vector<1x128xf32> to vector<56x128xf32>
    %5 = arith.addf %2, %4 : vector<56x128xf32>
    %cst_5 = arith.constant 0.000000e+00 : f32
    %6 = vector.broadcast %cst_5 : f32 to vector<56x128xf32>
    %7 = arith.maximumf %5, %6 : vector<56x128xf32>
    %8 = arith.truncf %7 : vector<56x128xf32> to vector<56x128xbf16>
    %c0_6 = arith.constant 0 : index
    %c0_7 = arith.constant 0 : index
    %9 = vector.load %arg4[%c0_6, %c0_7] : memref<56x128xbf16, #tpu.memory_space<vmem>>, vector<56x128xbf16>
    tpu.vector_store %arg4[%c0_6, %c0_7], %8 {strides = array<i32>} : memref<56x128xbf16, #tpu.memory_space<vmem>>, vector<56x128xbf16>,
    return
  }
  func.func @transform_0(%arg0: i32) -> (i32, i32) {
    %c0_i32 = arith.constant 0 : i32
    %c0_i32_0 = arith.constant 0 : i32
    return %arg0, %c0_i32 : i32, i32
  }
  func.func @transform_1(%arg0: i32) -> (i32, i32) {
    %c0_i32 = arith.constant 0 : i32
    %c0_i32_0 = arith.constant 0 : i32
    %c0_i32_1 = arith.constant 0 : i32
    return %c0_i32, %c0_i32_0 : i32, i32
  }
  func.func @transform_2(%arg0: i32) -> (i32, i32) {
    %c0_i32 = arith.constant 0 : i32
    %c0_i32_0 = arith.constant 0 : i32
    %c0_i32_1 = arith.constant 0 : i32
    return %c0_i32, %c0_i32_0 : i32, i32
  }
  func.func @transform_3(%arg0: i32) -> (i32, i32) {
    %c0_i32 = arith.constant 0 : i32
    %c0_i32_0 = arith.constant 0 : i32
    return %arg0, %c0_i32 : i32, i32
  }
}

module attributes {stable_mosaic.version = 11 : i64} {
  func.func @_roi_head_kernel(%arg0: i32, %arg1: i32, %arg2: memref<8x512xbf16, #tpu.memory_space<vmem>>, %arg3: memref<512x128xbf16, #tpu.memory_space<vmem>>, %arg4: memref<1x128xf32, #tpu.memory_space<vmem>>, %arg5: memref<128x128xbf16, #tpu.memory_space<vmem>>, %arg6: memref<1x128xf32, #tpu.memory_space<vmem>>, %arg7: memref<128x128xbf16, #tpu.memory_space<vmem>>, %arg8: memref<1x128xf32, #tpu.memory_space<vmem>>, %arg9: memref<8x128xf32, #tpu.memory_space<vmem>>, %arg10: memref<8x128xf32, #tpu.memory_space<vmem>>) attributes {dimension_semantics = [#tpu.dimension_semantics<parallel>, #tpu.dimension_semantics<arbitrary>], iteration_bounds = array<i64: 1, 2>, scalar_prefetch = 0 : i64, scratch_operands = 1 : i64, tpu.core_type = #tpu.core_type<tc>, window_params = [{transform_indices = @transform_0, window_bounds = array<i64: 8, 512>}, {transform_indices = @transform_1, window_bounds = array<i64: 512, 128>}, {pipeline_mode = #tpu.pipeline_mode<synchronous>, transform_indices = @transform_2, window_bounds = array<i64: 1, 128>}, {pipeline_mode = #tpu.pipeline_mode<synchronous>, transform_indices = @transform_3, window_bounds = array<i64: 128, 128>}, {pipeline_mode = #tpu.pipeline_mode<synchronous>, transform_indices = @transform_4, window_bounds = array<i64: 1, 128>}, {pipeline_mode = #tpu.pipeline_mode<synchronous>, transform_indices = @transform_5, window_bounds = array<i64: 128, 128>}, {pipeline_mode = #tpu.pipeline_mode<synchronous>, transform_indices = @transform_6, window_bounds = array<i64: 1, 128>}, {transform_indices = @transform_7, window_bounds = array<i64: 8, 128>}]} {
    %c0_i32 = arith.constant 0 : i32
    %0 = arith.cmpi eq, %arg1, %c0_i32 : i32
    %1 = arith.extui %0 : i1 to i32
    %c0_i32_0 = arith.constant 0 : i32
    %2 = arith.cmpi ne, %1, %c0_i32_0 : i32
    scf.if %2 {
      %cst_9 = arith.constant 0.000000e+00 : f32
      %12 = vector.broadcast %cst_9 : f32 to vector<8x128xf32>
      %c0_10 = arith.constant 0 : index
      %c0_11 = arith.constant 0 : index
      %13 = vector.load %arg10[%c0_10, %c0_11] : memref<8x128xf32, #tpu.memory_space<vmem>>, vector<8x128xf32>
      tpu.vector_store %arg10[%c0_10, %c0_11], %12 {strides = array<i32>} : memref<8x128xf32, #tpu.memory_space<vmem>>, vector<8x128xf32>,
    } else {
    }
    %c0 = arith.constant 0 : index
    %c0_1 = arith.constant 0 : index
    %3 = vector.load %arg10[%c0, %c0_1] : memref<8x128xf32, #tpu.memory_space<vmem>>, vector<8x128xf32>
    %c0_2 = arith.constant 0 : index
    %c0_3 = arith.constant 0 : index
    %4 = vector.load %arg2[%c0_2, %c0_3] : memref<8x512xbf16, #tpu.memory_space<vmem>>, vector<8x512xbf16>
    %c0_4 = arith.constant 0 : index
    %c0_5 = arith.constant 0 : index
    %5 = vector.load %arg3[%c0_4, %c0_5] : memref<512x128xbf16, #tpu.memory_space<vmem>>, vector<512x128xbf16>
    %cst = arith.constant dense<0.000000e+00> : vector<8x128xf32>
    %6 = tpu.matmul %4, %5, %cst {dimension_numbers = #tpu.dot_dimension_numbers<[1], [0], [0], [1], [0, 0, 1, 1], [], []>} : vector<8x512xbf16>, vector<512x128xbf16>, vector<8x128xf32> -> vector<8x128xf32>
    %7 = arith.addf %3, %6 : vector<8x128xf32>
    %c0_6 = arith.constant 0 : index
    %c0_7 = arith.constant 0 : index
    %8 = vector.load %arg10[%c0_6, %c0_7] : memref<8x128xf32, #tpu.memory_space<vmem>>, vector<8x128xf32>
    tpu.vector_store %arg10[%c0_6, %c0_7], %7 {strides = array<i32>} : memref<8x128xf32, #tpu.memory_space<vmem>>, vector<8x128xf32>,
    %c1_i32 = arith.constant 1 : i32
    %9 = arith.cmpi eq, %arg1, %c1_i32 : i32
    %10 = arith.extui %9 : i1 to i32
    %c0_i32_8 = arith.constant 0 : i32
    %11 = arith.cmpi ne, %10, %c0_i32_8 : i32
    scf.if %11 {
      %c0_9 = arith.constant 0 : index
      %c0_10 = arith.constant 0 : index
      %12 = vector.load %arg10[%c0_9, %c0_10] : memref<8x128xf32, #tpu.memory_space<vmem>>, vector<8x128xf32>
      %c0_11 = arith.constant 0 : index
      %c0_12 = arith.constant 0 : index
      %13 = vector.load %arg4[%c0_11, %c0_12] : memref<1x128xf32, #tpu.memory_space<vmem>>, vector<1x128xf32>
      %14 = vector.broadcast %13 : vector<1x128xf32> to vector<8x128xf32>
      %15 = arith.addf %12, %14 : vector<8x128xf32>
      %cst_13 = arith.constant 0.000000e+00 : f32
      %16 = vector.broadcast %cst_13 : f32 to vector<8x128xf32>
      %17 = arith.maximumf %15, %16 : vector<8x128xf32>
      %18 = arith.truncf %17 : vector<8x128xf32> to vector<8x128xbf16>
      %c0_14 = arith.constant 0 : index
      %c0_15 = arith.constant 0 : index
      %19 = vector.load %arg5[%c0_14, %c0_15] : memref<128x128xbf16, #tpu.memory_space<vmem>>, vector<128x128xbf16>
      %cst_16 = arith.constant dense<0.000000e+00> : vector<8x128xf32>
      %20 = tpu.matmul %18, %19, %cst_16 {dimension_numbers = #tpu.dot_dimension_numbers<[1], [0], [0], [1], [0, 0, 1, 1], [], []>} : vector<8x128xbf16>, vector<128x128xbf16>, vector<8x128xf32> -> vector<8x128xf32>
      %c0_17 = arith.constant 0 : index
      %c0_18 = arith.constant 0 : index
      %21 = vector.load %arg6[%c0_17, %c0_18] : memref<1x128xf32, #tpu.memory_space<vmem>>, vector<1x128xf32>
      %22 = vector.broadcast %21 : vector<1x128xf32> to vector<8x128xf32>
      %23 = arith.addf %20, %22 : vector<8x128xf32>
      %cst_19 = arith.constant 0.000000e+00 : f32
      %24 = vector.broadcast %cst_19 : f32 to vector<8x128xf32>
      %25 = arith.maximumf %23, %24 : vector<8x128xf32>
      %26 = arith.truncf %25 : vector<8x128xf32> to vector<8x128xbf16>
      %c0_20 = arith.constant 0 : index
      %c0_21 = arith.constant 0 : index
      %27 = vector.load %arg7[%c0_20, %c0_21] : memref<128x128xbf16, #tpu.memory_space<vmem>>, vector<128x128xbf16>
      %cst_22 = arith.constant dense<0.000000e+00> : vector<8x128xf32>
      %28 = tpu.matmul %26, %27, %cst_22 {dimension_numbers = #tpu.dot_dimension_numbers<[1], [0], [0], [1], [0, 0, 1, 1], [], []>} : vector<8x128xbf16>, vector<128x128xbf16>, vector<8x128xf32> -> vector<8x128xf32>
      %c0_23 = arith.constant 0 : index
      %c0_24 = arith.constant 0 : index
      %29 = vector.load %arg8[%c0_23, %c0_24] : memref<1x128xf32, #tpu.memory_space<vmem>>, vector<1x128xf32>
      %30 = vector.broadcast %29 : vector<1x128xf32> to vector<8x128xf32>
      %31 = arith.addf %28, %30 : vector<8x128xf32>
      %32 = tpu.iota {dimensions = array<i32: 1>} : vector<8x128xi32>
      %c2_i32 = arith.constant 2 : i32
      %33 = vector.broadcast %c2_i32 : i32 to vector<8x128xi32>
      %34 = arith.cmpi slt, %32, %33 : vector<8x128xi32>
      %cst_25 = arith.constant -1.000000e+30 : f32
      %35 = vector.broadcast %cst_25 : f32 to vector<8x128xf32>
      %36 = arith.select %34, %31, %35 : vector<8x128xi1>, vector<8x128xf32>
      %cst_26 = arith.constant dense<0xFF800000> : vector<8xf32>
      %37 = vector.multi_reduction <maximumf>, %36, %cst_26 [1] : vector<8x128xf32> to vector<8xf32>
      %38 = vector.shape_cast %37 : vector<8xf32> to vector<8x1xf32>
      %39 = vector.broadcast %38 : vector<8x1xf32> to vector<8x128xf32>
      %40 = arith.subf %36, %39 : vector<8x128xf32>
      %41 = math.exp %40 : vector<8x128xf32>
      %cst_27 = arith.constant 0.000000e+00 : f32
      %42 = vector.broadcast %cst_27 : f32 to vector<8x128xf32>
      %43 = arith.select %34, %41, %42 : vector<8x128xi1>, vector<8x128xf32>
      %cst_28 = arith.constant dense<0.000000e+00> : vector<8xf32>
      %44 = vector.multi_reduction <add>, %43, %cst_28 [1] : vector<8x128xf32> to vector<8xf32>
      %45 = vector.shape_cast %44 : vector<8xf32> to vector<8x1xf32>
      %46 = tpu.reciprocal %45 {approx = true} : vector<8x1xf32> -> vector<8x1xf32>
      %47 = vector.broadcast %46 : vector<8x1xf32> to vector<8x128xf32>
      %48 = arith.mulf %43, %47 : vector<8x128xf32>
      %49 = arith.select %34, %48, %31 : vector<8x128xi1>, vector<8x128xf32>
      %c0_29 = arith.constant 0 : index
      %c0_30 = arith.constant 0 : index
      %50 = vector.load %arg9[%c0_29, %c0_30] : memref<8x128xf32, #tpu.memory_space<vmem>>, vector<8x128xf32>
      tpu.vector_store %arg9[%c0_29, %c0_30], %49 {strides = array<i32>} : memref<8x128xf32, #tpu.memory_space<vmem>>, vector<8x128xf32>,
    } else {
    }
    return
  }
  func.func @transform_0(%arg0: i32, %arg1: i32) -> (i32, i32) {
    %c0_i32 = arith.constant 0 : i32
    return %arg0, %arg1 : i32, i32
  }
  func.func @transform_1(%arg0: i32, %arg1: i32) -> (i32, i32) {
    %c0_i32 = arith.constant 0 : i32
    %c0_i32_0 = arith.constant 0 : i32
    return %arg1, %c0_i32 : i32, i32
  }
  func.func @transform_2(%arg0: i32, %arg1: i32) -> (i32, i32) {
    %c0_i32 = arith.constant 0 : i32
    %c0_i32_0 = arith.constant 0 : i32
    %c0_i32_1 = arith.constant 0 : i32
    return %c0_i32, %c0_i32_0 : i32, i32
  }
  func.func @transform_3(%arg0: i32, %arg1: i32) -> (i32, i32) {
    %c0_i32 = arith.constant 0 : i32
    %c0_i32_0 = arith.constant 0 : i32
    %c0_i32_1 = arith.constant 0 : i32
    return %c0_i32, %c0_i32_0 : i32, i32
  }
  func.func @transform_4(%arg0: i32, %arg1: i32) -> (i32, i32) {
    %c0_i32 = arith.constant 0 : i32
    %c0_i32_0 = arith.constant 0 : i32
    %c0_i32_1 = arith.constant 0 : i32
    return %c0_i32, %c0_i32_0 : i32, i32
  }
  func.func @transform_5(%arg0: i32, %arg1: i32) -> (i32, i32) {
    %c0_i32 = arith.constant 0 : i32
    %c0_i32_0 = arith.constant 0 : i32
    %c0_i32_1 = arith.constant 0 : i32
    return %c0_i32, %c0_i32_0 : i32, i32
  }
  func.func @transform_6(%arg0: i32, %arg1: i32) -> (i32, i32) {
    %c0_i32 = arith.constant 0 : i32
    %c0_i32_0 = arith.constant 0 : i32
    %c0_i32_1 = arith.constant 0 : i32
    return %c0_i32, %c0_i32_0 : i32, i32
  }
  func.func @transform_7(%arg0: i32, %arg1: i32) -> (i32, i32) {
    %c0_i32 = arith.constant 0 : i32
    %c0_i32_0 = arith.constant 0 : i32
    return %arg0, %c0_i32 : i32, i32
  }
}

</mosaic_0001>

<llo_original>
// kernel: _rcnn_forward.2
$region0: #{_rcnn_forward.2}
  #allocation0 [shape = 'u32[]', space=smem, size = 0x4, offset = 0x4, fixed_abs, tag = 'smem constant byte address 0x4 - core index']
  #allocation1 [shape = 'u32[144,128]{1,0:T(1,128)}', space=vmem, size = 0x12000, scoped, tag = 'internal scratch']
  %s0 = inlined_call_operand.vmem [shape: bf16[112,27], index: 0, kind: input, shape index: {}]
  %s1 = inlined_call_operand.vmem [shape: bf16[27,128], index: 1, kind: input, shape index: {}]
  %s2 = inlined_call_operand.vmem [shape: f32[1,128], index: 2, kind: input, shape index: {}]
  %s3 = inlined_call_operand.vmem [shape: bf16[112,128], index: 3, kind: output, shape index: {}]
  %s4 = sld [smem:[#allocation0]]
  $region45: #{_rcnn_forward.2} parent=0
    _
  %s6 = ssub.s32 1, %s4
  %s7 = scalar_select 0, %s6, %s4
  loop: start=0, step=1, limit=4
  $region2: #{_rcnn_forward.2} parent=0 // loop_pre_header
    _
  $region3: #{_rcnn_forward.2} parent=0 // loop_header
    %s9 = sphi 0, %s13
    %p10 = scmp.ge.s32.totalorder %s9, 4
    %s19 = sphi 0, %s21
    %s22 = sphi 0, %s19
    %s23 = sphi 0, %s22
    %s39 = sphi 0, %s23
    %s43 = sphi 0, %s43
    %s45 = sphi 0, %s43
    %s46 = sphi 0, %s45
    %s60 = sphi 0, %s46
    %s64 = sphi 0, %s64
    %s66 = sphi 0, %s64
    %s67 = sphi 0, %s66
    %s81 = sphi 0, %s67
    %s87 = sphi 0, %s89
    %s90 = sphi 0, %s87
    %s91 = sphi 0, %s90
    %s107 = sphi 0, %s91
  $region4: #{_rcnn_forward.2} parent=0 // loop_header_branch
    %12 = sbr.rel (%p10) target = $region8
  $region5: #{_rcnn_forward.2} parent=0 // loop_body
    %s14 = ssub.s32 %s9, 1
    %s15 = ssub.s32 %s9, 2
    %s16 = sadd.s32 %s9, 1
    %s17 = ssub.s32 %s9, %s16
    %p18 = scmp.eq.s32.totalorder %s17, 0
    %s20 = sadd.s32 %s19, 1
    %s21 = scalar_select %p18, %s19, %s20
    %p24 = pneg %p18
    %p25 = scmp.eq.s32.totalorder %s9, 1
    %p26 = por %p24, %p25
    %p27 = scmp.ne.s32.totalorder %s19, %s22
    %p28 = scmp.eq.s32.totalorder %s9, 0
    %p29 = por %p27, %p28
    %p30 = scmp.ne.s32.totalorder %s19, %s22
    %p31 = scmp.eq.s32.totalorder %s14, 1
    %p32 = por %p30, %p31
    %p33 = scmp.ne.s32.totalorder %s22, %s23
    %p34 = scmp.eq.s32.totalorder %s14, 0
    %p35 = por %p33, %p34
    %p36 = scmp.ne.s32.totalorder %s22, %s23
    %p37 = scmp.eq.s32.totalorder %s15, 1
    %p38 = por %p36, %p37
    %p40 = scmp.ne.s32.totalorder %s23, %s39
    %p41 = scmp.eq.s32.totalorder %s15, 0
    %p42 = por %p40, %p41
    %s44 = sadd.s32 %s43, 1
    %p47 = scmp.eq.s32.totalorder %s9, 1
    %p48 = scmp.ne.s32.totalorder %s43, %s45
    %p49 = scmp.eq.s32.totalorder %s9, 0
    %p50 = por %p48, %p49
    %p51 = scmp.ne.s32.totalorder %s43, %s45
    %p52 = scmp.eq.s32.totalorder %s14, 1
    %p53 = por %p51, %p52
    %p54 = scmp.ne.s32.totalorder %s45, %s46
    %p55 = scmp.eq.s32.totalorder %s14, 0
    %p56 = por %p54, %p55
    %p57 = scmp.ne.s32.totalorder %s45, %s46
    %p58 = scmp.eq.s32.totalorder %s15, 1
    %p59 = por %p57, %p58
    %p61 = scmp.ne.s32.totalorder %s46, %s60
    %p62 = scmp.eq.s32.totalorder %s15, 0
    %p63 = por %p61, %p62
    %s65 = sadd.s32 %s64, 1
    %p68 = scmp.eq.s32.totalorder %s9, 1
    %p69 = scmp.ne.s32.totalorder %s64, %s66
    %p70 = scmp.eq.s32.totalorder %s9, 0
    %p71 = por %p69, %p70
    %p72 = scmp.ne.s32.totalorder %s64, %s66
    %p73 = scmp.eq.s32.totalorder %s14, 1
    %p74 = por %p72, %p73
    %p75 = scmp.ne.s32.totalorder %s66, %s67
    %p76 = scmp.eq.s32.totalorder %s14, 0
    %p77 = por %p75, %p76
    %p78 = scmp.ne.s32.totalorder %s66, %s67
    %p79 = scmp.eq.s32.totalorder %s15, 1
    %p80 = por %p78, %p79
    %p82 = scmp.ne.s32.totalorder %s67, %s81
    %p83 = scmp.eq.s32.totalorder %s15, 0
    %p84 = por %p82, %p83
    %s85 = ssub.s32 %s9, %s16
    %p86 = scmp.eq.s32.totalorder %s85, 0
    %s88 = sadd.s32 %s87, 1
    %s89 = scalar_select %p86, %s87, %s88
    %p92 = pneg %p86
    %p93 = scmp.eq.s32.totalorder %s9, 1
    %p94 = por %p92, %p93
    %p95 = scmp.ne.s32.totalorder %s87, %s90
    %p96 = scmp.eq.s32.totalorder %s9, 0
    %p97 = por %p95, %p96
    %p98 = scmp.ne.s32.totalorder %s87, %s90
    %p99 = scmp.eq.s32.totalorder %s14, 1
    %p100 = por %p98, %p99
    %p101 = scmp.ne.s32.totalorder %s90, %s91
    %p102 = scmp.eq.s32.totalorder %s14, 0
    %p103 = por %p101, %p102
    %p104 = scmp.ne.s32.totalorder %s90, %s91
    %p105 = scmp.eq.s32.totalorder %s15, 1
    %p106 = por %p104, %p105
    %p108 = scmp.ne.s32.totalorder %s91, %s107
    %p109 = scmp.eq.s32.totalorder %s15, 0
    %p110 = por %p108, %p109
    %p111 = scmp.le.s32.totalorder 1, %s9
    %p112 = scmp.lt.s32.totalorder %s9, 3
    %p113 = pnand %p111, %p112
    %p114 = pneg %p113
    // Predicated region
    $region9: #{_rcnn_forward.2} parent=5 // pred_check
      _
    $region10: #{_rcnn_forward.2} parent=5 // pred_check_branch
      %116 = sbr.rel (%p113) target = $region12
    $region11: #{_rcnn_forward.2} parent=5 // pred_region
      %s117 = ssub.s32 %s9, 1
      // Predicated region
      $region13: #{_rcnn_forward.2} parent=11 // pred_check
        %p118 = pneg %p56
      $region14: #{_rcnn_forward.2} parent=11 // pred_check_branch
        %120 = sbr.rel (%p118) target = $region16
      $region15: #{_rcnn_forward.2} parent=11 // pred_region
        _
      $region16: #{_rcnn_forward.2} parent=11 // pred_fallthru
        _
      // Predicated region
      $region17: #{_rcnn_forward.2} parent=11 // pred_check
        %p121 = pneg %p77
      $region18: #{_rcnn_forward.2} parent=11 // pred_check_branch
        %123 = sbr.rel (%p121) target = $region20
      $region19: #{_rcnn_forward.2} parent=11 // pred_region
        _
      $region20: #{_rcnn_forward.2} parent=11 // pred_fallthru
        _
    $region12: #{_rcnn_forward.2} parent=5 // pred_fallthru
      _
    %p124 = scmp.lt.s32.totalorder %s9, 2
    // Predicated region
    $region21: #{_rcnn_forward.2} parent=5 // pred_check
      %p125 = pneg %p124
    $region22: #{_rcnn_forward.2} parent=5 // pred_check_branch
      %127 = sbr.rel (%p125) target = $region24
    $region23: #{_rcnn_forward.2} parent=5 // pred_region
      // Predicated region
      $region25: #{_rcnn_forward.2} parent=23 // pred_check
        %p128 = pneg %p29
      $region26: #{_rcnn_forward.2} parent=23 // pred_check_branch
        %130 = sbr.rel (%p128) target = $region28
      $region27: #{_rcnn_forward.2} parent=23 // pred_region
        %s131 = smul.u32 7, %s9
        %p132 = scmp.lt.s32.totalorder %s131, 13
        %s133 = scalar_select %p132, %s131, 13
        %s134 = smul.addr %s133, 4
        %s135 = scalar_lea.vmem %s0, %s134
        %s136 = smul.u32 7, %s9
      $region28: #{_rcnn_forward.2} parent=23 // pred_fallthru
        _
    $region24: #{_rcnn_forward.2} parent=5 // pred_fallthru
      _
    %p137 = scmp.le.s32.totalorder 1, %s9
    %p138 = scmp.lt.s32.totalorder %s9, 3
    %p139 = pnand %p137, %p138
    %p140 = pneg %p139
    // Predicated region
    $region29: #{_rcnn_forward.2} parent=5 // pred_check
      _
    $region30: #{_rcnn_forward.2} parent=5 // pred_check_branch
      %142 = sbr.rel (%p139) target = $region32
    $region31: #{_rcnn_forward.2} parent=5 // pred_region
      %s143 = ssub.s32 %s9, 1
      %s144 = smul.u32 7, %s14
      %p145 = scmp.lt.s32.totalorder %s144, 13
      %s146 = scalar_select %p145, %s144, 13
      %s147 = smul.addr %s146, 4
      %s148 = scalar_lea.vmem %s0, %s147
      %p149 = pneg %p35
      %p150 = pneg %p32
      %p151 = pneg %p56
      %p152 = pneg %p53
      %p153 = pneg %p77
      %p154 = pneg %p74
      %p155 = pneg %p103
      %p156 = pneg %p100
      %s157 = smul.u32 7, %s14
      %p158 = scmp.lt.s32.totalorder %s157, 13
      %s159 = scalar_select %p158, %s157, 13
      %s160 = smul.addr %s159, 4
      %s161 = scalar_lea.vmem %s3, %s160
      %s162 = smul.u32 7, %s14
      %p163 = scmp.lt.s32.totalorder %s162, 13
      %s164 = scalar_select %p163, %s162, 13
      %s165 = smul.addr %s164, 4
      %s166 = scalar_lea.vmem %s0, %s165
      %s167 = smul.u32 7, %s14
      %s168 = smul.u32 7, %s14
      %p169 = scmp.lt.s32.totalorder %s168, 13
      %s170 = scalar_select %p169, %s168, 13
      %s171 = smul.addr %s170, 4
      %s172 = scalar_lea.vmem %s3, %s171
      %s173 = smul.u32 7, %s14
      %v175 = vld [vmem:[%s166] sm:$0xf]
      %v176 = vld [vmem:[%s166 + $0x4] sm:$0xf]
      %v177 = vld [vmem:[%s166 + $0x8] sm:$0xf]
      %v178 = vld [vmem:[%s166 + $0xc] sm:$0xf]
      %v179 = vld [vmem:[%s166 + $0x10] sm:$0xf]
      %v180 = vld [vmem:[%s166 + $0x14] sm:$0xf]
      %v181 = vld [vmem:[%s166 + $0x18] sm:$0xf]
      %v182 = vld [vmem:[%s1] sm:$0xf]
      %v183 = vld [vmem:[%s1 + $0x4] sm:$0xf]
      %v184 = vld [vmem:[%s1 + $0x8] sm:$0xf]
      %v185 = vld [vmem:[%s1 + $0xc] sm:$0x3]
      %v186 = vld [vmem:[%s2] sm:$0x1]
      %v188 = vlaneseq
      %v189 = vshrl.u32 %v188, 7
      %v190 = vsub.s32 0, %v189
      %v191 = vrot.slane %v186, %v190
      %v200 = vunpack.c.l.b16 %v175
      %v201 = vunpack.c.l.b16 %v176
      %v202 = vunpack.c.l.b16 %v177
      %v203 = vunpack.c.l.b16 %v178
      %v204 = vunpack.c.l.b16 %v179
      %v205 = vunpack.c.l.b16 %v180
      %v206 = vunpack.c.l.b16 %v181
      %v207 = vpack.c.b16 %v201, %v200
      %v208 = vpack.c.b16 %v203, %v202
      %v209 = vpack.c.b16 %v205, %v204
      %v210 = vpack.c.b16 %v206, %v206
      %v215 = vunpack.c.l.b16 %v182
      %v216 = vunpack.c.l.b16 %v183
      %v217 = vunpack.c.l.b16 %v184
      %v218 = vunpack.c.l.b16 %v185
      %v219 = vpack.c.b16 %v216, %v215
      %v220 = vpack.c.b16 %v218, %v217
      %vm222 = vcmask 220160
      %v224 = vsel %vm222, %v207, 0
      %v227 = vsel %vm222, %v208, 0
      %v230 = vsel %vm222, %v209, 0
      %v233 = vsel %vm222, %v210, 0
      %vm235 = vcmask 1044480
      %vm236 = vcmask 1045504
      %v237 = vsel %vm235, 4294967295, 65535
      %v238 = vsel %vm236, %v237, 0
      %v240 = vand.u32 %v220, %v238
      %242 = vmatprep.subr.bf16.mxu0 0
      %243 = vmatpush1.bf16.msra.mxu0 0
      %244 = vmatprep.subr.bf16.mxu0 0
      %245 = vmatpush1.bf16.msra.mxu0 0
      %246 = vmatprep.subr.bf16.mxu0 0
      %247 = vmatpush1.bf16.msra.mxu0 0
      %248 = vmatprep.subr.bf16.mxu0 0
      %249 = vmatpush1.bf16.msra.mxu0 0
      %250 = vmatprep.subr.bf16.mxu0 0
      %251 = vmatpush1.bf16.msra.mxu0 0
      %252 = vmatprep.subr.bf16.mxu0 0
      %253 = vmatpush1.bf16.msra.mxu0 0
      %254 = vmatprep.subr.bf16.mxu0 0
      %255 = vmatpush1.bf16.msra.mxu0 %v240
      %256 = vmatprep.subr.bf16.mxu0 0
      %257 = vmatpush1.bf16.msra.mxu0 %v219
      %258 = vmatprep.subr.bf16.mxu0 0
      %259 = vmatpush2.bf16.msra.mxu0 0
      %260 = vmatprep.subr.bf16.mxu0 0
      %261 = vmatpush2.bf16.msra.mxu0 0
      %262 = vmatprep.subr.bf16.mxu0 0
      %263 = vmatpush2.bf16.msra.mxu0 0
      %264 = vmatprep.subr.bf16.mxu0 0
      %265 = vmatpush2.bf16.msra.mxu0 0
      %266 = vmatprep.subr.bf16.mxu0 0
      %267 = vmatpush2.bf16.msra.mxu0 0
      %268 = vmatprep.subr.bf16.mxu0 0
      %269 = vmatpush2.bf16.msra.mxu0 0
      %270 = vmatprep.subr.bf16.mxu0 0
      %271 = vmatpush2.bf16.msra.mxu0 0
      %272 = vmatprep.subr.bf16.mxu0 0
      %273 = vmatpush2.bf16.msra.mxu0 0
      %274 = vmatprep.mubr.bf16.mxu0 0
      %275 = vmatmul.mubr.bf16.gmra.mxu0 %v224
      %v276 = vpop.f32.mrf.mxu0
      %v277 = vadd.f32 %v191, %v276
      %v278 = vpop.f32.mrf.mxu0
      %v279 = vpop.f32.mrf.mxu0
      %v280 = vadd.f32 %v191, %v279
      %v281 = vpop.f32.mrf.mxu0
      %282 = vmatprep.mubr.bf16.mxu0 0
      %283 = vmatmul.mubr.bf16.gmra.mxu0 %v227
      %v284 = vpop.f32.mrf.mxu0
      %v285 = vadd.f32 %v191, %v284
      %v286 = vpop.f32.mrf.mxu0
      %v287 = vpop.f32.mrf.mxu0
      %v288 = vadd.f32 %v191, %v287
      %v289 = vpop.f32.mrf.mxu0
      %290 = vmatprep.mubr.bf16.mxu0 0
      %291 = vmatmul.mubr.bf16.gmra.mxu0 %v230
      %v292 = vpop.f32.mrf.mxu0
      %v293 = vadd.f32 %v191, %v292
      %v294 = vpop.f32.mrf.mxu0
      %v295 = vpop.f32.mrf.mxu0
      %v296 = vadd.f32 %v191, %v295
      %v297 = vpop.f32.mrf.mxu0
      %298 = vmatprep.mubr.bf16.mxu0 0
      %299 = vmatmul.mubr.bf16.gmra.mxu0 %v233
      %v300 = vpop.f32.mrf.mxu0
      %v301 = vadd.f32 %v191, %v300
      %v302 = vpop.f32.mrf.mxu0
      %v303 = vpop.f32.mrf.mxu0
      %v304 = vpop.f32.mrf.mxu0
      %305 = vdwg.mxu0
      %v306 = vmax.f32 %v277, 0.0
      %v307 = vmax.f32 %v280, 0.0
      %v308 = vmax.f32 %v285, 0.0
      %v309 = vmax.f32 %v288, 0.0
      %v310 = vmax.f32 %v293, 0.0
      %v311 = vmax.f32 %v296, 0.0
      %v312 = vmax.f32 %v301, 0.0
      %v313 = vpack.c.bf16 %v307, %v306
      %v314 = vpack.c.bf16 %v309, %v308
      %v315 = vpack.c.bf16 %v311, %v310
      %v316 = vpack.c.bf16 %v312, %v312
      %v321 = vunpack.c.l.b16 %v313
      %v322 = vunpack.c.h.b16 %v313
      %v323 = vunpack.c.l.b16 %v314
      %v324 = vunpack.c.h.b16 %v314
      %v325 = vunpack.c.l.b16 %v315
      %v326 = vunpack.c.h.b16 %v315
      %v327 = vunpack.c.l.b16 %v316
      %v328 = vpack.c.b16 %v321, %v321
      %v329 = vpack.c.b16 %v322, %v322
      %v330 = vpack.c.b16 %v323, %v323
      %v331 = vpack.c.b16 %v324, %v324
      %v332 = vpack.c.b16 %v325, %v325
      %v333 = vpack.c.b16 %v326, %v326
      %v334 = vpack.c.b16 %v327, %v327
      %342 = vst [vmem:[%s172] sm:$0xf] %v328
      %343 = vst [vmem:[%s172 + $0x4] sm:$0xf] %v329
      %344 = vst [vmem:[%s172 + $0x8] sm:$0xf] %v330
      %345 = vst [vmem:[%s172 + $0xc] sm:$0xf] %v331
      %346 = vst [vmem:[%s172 + $0x10] sm:$0xf] %v332
      %347 = vst [vmem:[%s172 + $0x14] sm:$0xf] %v333
      %348 = vst [vmem:[%s172 + $0x18] sm:$0xf] %v334
      %s349 = smul.u32 7, %s14
      %p350 = scmp.lt.s32.totalorder %s349, 13
      %s351 = scalar_select %p350, %s349, 13
      %s352 = smul.addr %s351, 4
      %s353 = scalar_lea.vmem %s3, %s352
      // Predicated region
      $region33: #{_rcnn_forward.2} parent=31 // pred_check
        %p354 = pneg %p100
      $region34: #{_rcnn_forward.2} parent=31 // pred_check_branch
        %356 = sbr.rel (%p354) target = $region36
      $region35: #{_rcnn_forward.2} parent=31 // pred_region
        %s357 = smul.u32 7, %s14
      $region36: #{_rcnn_forward.2} parent=31 // pred_fallthru
        _
    $region32: #{_rcnn_forward.2} parent=5 // pred_fallthru
      _
    %p358 = scmp.le.s32.totalorder 2, %s9
    // Predicated region
    $region37: #{_rcnn_forward.2} parent=5 // pred_check
      %p359 = pneg %p358
    $region38: #{_rcnn_forward.2} parent=5 // pred_check_branch
      %361 = sbr.rel (%p359) target = $region40
    $region39: #{_rcnn_forward.2} parent=5 // pred_region
      %s362 = ssub.s32 %s9, 2
      // Predicated region
      $region41: #{_rcnn_forward.2} parent=39 // pred_check
        %p363 = pneg %p106
      $region42: #{_rcnn_forward.2} parent=39 // pred_check_branch
        %365 = sbr.rel (%p363) target = $region44
      $region43: #{_rcnn_forward.2} parent=39 // pred_region
        %s366 = smul.u32 7, %s15
        %p367 = scmp.lt.s32.totalorder %s366, 13
        %s368 = scalar_select %p367, %s366, 13
        %s369 = smul.addr %s368, 4
        %s370 = scalar_lea.vmem %s3, %s369
      $region44: #{_rcnn_forward.2} parent=39 // pred_fallthru
        _
    $region40: #{_rcnn_forward.2} parent=5 // pred_fallthru
      _
  $region6: #{_rcnn_forward.2} parent=0 // loop_footer
    %s13 = sadd.s32 1, %s9
  $region7: #{_rcnn_forward.2} parent=0 // loop_footer_branch
    %8 = sbr.rel target = $region3
  $region8: #{_rcnn_forward.2} parent=0 // loop_exit
    _

// kernel: _rcnn_forward.3
$region0: #{_rcnn_forward.3}
  #allocation0 [shape = 'u32[]', space=smem, size = 0x4, offset = 0x4, fixed_abs, tag = 'smem constant byte address 0x4 - core index']
  #allocation1 [shape = 'u32[144,128]{1,0:T(1,128)}', space=vmem, size = 0x12000, scoped, tag = 'internal scratch']
  #allocation2 [shape = 'f32[8,128]{1,0:T(8,128)}', space=vmem, size = 0x1000, scoped, tag = 'scratch operand']
  %s0 = inlined_call_operand.vmem [shape: bf16[8,1024], index: 0, kind: input, shape index: {}]
  %s1 = inlined_call_operand.vmem [shape: bf16[1024,128], index: 1, kind: input, shape index: {}]
  %s2 = inlined_call_operand.vmem [shape: f32[1,128], index: 2, kind: input, shape index: {}]
  %s3 = inlined_call_operand.vmem [shape: bf16[128,128], index: 3, kind: input, shape index: {}]
  %s4 = inlined_call_operand.vmem [shape: f32[1,128], index: 4, kind: input, shape index: {}]
  %s5 = inlined_call_operand.vmem [shape: bf16[128,128], index: 5, kind: input, shape index: {}]
  %s6 = inlined_call_operand.vmem [shape: f32[1,128], index: 6, kind: input, shape index: {}]
  %s7 = inlined_call_operand.vmem [shape: f32[8,128], index: 7, kind: output, shape index: {}]
  %s8 = sld [smem:[#allocation0]]
  $region69: #{_rcnn_forward.3} parent=0
    _
  %s10 = ssub.s32 1, %s8
  %s11 = scalar_select 0, %s10, %s8
  loop: start=0, step=1, limit=4
  $region2: #{_rcnn_forward.3} parent=0 // loop_pre_header
    _
  $region3: #{_rcnn_forward.3} parent=0 // loop_header
    %s13 = sphi 0, %s17
    %p14 = scmp.ge.s32.totalorder %s13, 4
    %s20 = sphi 0, %s32
    %s21 = sphi 0, %s28
    %s22 = sphi 0, %s20
    %s23 = sphi 0, %s21
    %s24 = sphi 0, %s22
    %s25 = sphi 0, %s23
    %s37 = sphi 0, %s39
    %s40 = sphi 0, %s37
    %s41 = sphi 0, %s40
    %s57 = sphi 0, %s41
    %s63 = sphi 0, %s65
    %s66 = sphi 0, %s63
    %s67 = sphi 0, %s66
    %s83 = sphi 0, %s67
    %s87 = sphi 0, %s87
    %s89 = sphi 0, %s87
    %s90 = sphi 0, %s89
    %s104 = sphi 0, %s90
    %s108 = sphi 0, %s108
    %s110 = sphi 0, %s108
    %s111 = sphi 0, %s110
    %s125 = sphi 0, %s111
    %s129 = sphi 0, %s129
    %s131 = sphi 0, %s129
    %s132 = sphi 0, %s131
    %s146 = sphi 0, %s132
    %s150 = sphi 0, %s150
    %s152 = sphi 0, %s150
    %s153 = sphi 0, %s152
    %s167 = sphi 0, %s153
    %s171 = sphi 0, %s171
    %s173 = sphi 0, %s171
    %s174 = sphi 0, %s173
    %s188 = sphi 0, %s174
    %s194 = sphi 0, %s196
    %s197 = sphi 0, %s194
    %s198 = sphi 0, %s197
    %s214 = sphi 0, %s198
  $region4: #{_rcnn_forward.3} parent=0 // loop_header_branch
    %16 = sbr.rel (%p14) target = $region8
  $region5: #{_rcnn_forward.3} parent=0 // loop_body
    %s18 = ssub.s32 %s13, 1
    %s19 = ssub.s32 %s13, 2
    %s26 = sadd.s32 1, %s21
    %p27 = scmp.ge.s32.totalorder %s26, 2
    %s28 = scalar_select %p27, 0, %s26
    %s29 = sadd.s32 1, %s20
    %s30 = scalar_select %p27, %s29, %s20
    %p31 = scmp.ge.s32.totalorder %s30, 1
    %s32 = scalar_select %p31, 0, %s30
    %s33 = ssub.s32 %s20, %s32
    %s34 = ssub.s32 %s21, %s28
    %s35 = sor.u32 %s33, %s34
    %p36 = scmp.eq.s32.totalorder %s35, 0
    %s38 = sadd.s32 %s37, 1
    %s39 = scalar_select %p36, %s37, %s38
    %p42 = pneg %p36
    %p43 = scmp.eq.s32.totalorder %s13, 1
    %p44 = por %p42, %p43
    %p45 = scmp.ne.s32.totalorder %s37, %s40
    %p46 = scmp.eq.s32.totalorder %s13, 0
    %p47 = por %p45, %p46
    %p48 = scmp.ne.s32.totalorder %s37, %s40
    %p49 = scmp.eq.s32.totalorder %s18, 1
    %p50 = por %p48, %p49
    %p51 = scmp.ne.s32.totalorder %s40, %s41
    %p52 = scmp.eq.s32.totalorder %s18, 0
    %p53 = por %p51, %p52
    %p54 = scmp.ne.s32.totalorder %s40, %s41
    %p55 = scmp.eq.s32.totalorder %s19, 1
    %p56 = por %p54, %p55
    %p58 = scmp.ne.s32.totalorder %s41, %s57
    %p59 = scmp.eq.s32.totalorder %s19, 0
    %p60 = por %p58, %p59
    %s61 = ssub.s32 %s21, %s28
    %p62 = scmp.eq.s32.totalorder %s61, 0
    %s64 = sadd.s32 %s63, 1
    %s65 = scalar_select %p62, %s63, %s64
    %p68 = pneg %p62
    %p69 = scmp.eq.s32.totalorder %s13, 1
    %p70 = por %p68, %p69
    %p71 = scmp.ne.s32.totalorder %s63, %s66
    %p72 = scmp.eq.s32.totalorder %s13, 0
    %p73 = por %p71, %p72
    %p74 = scmp.ne.s32.totalorder %s63, %s66
    %p75 = scmp.eq.s32.totalorder %s18, 1
    %p76 = por %p74, %p75
    %p77 = scmp.ne.s32.totalorder %s66, %s67
    %p78 = scmp.eq.s32.totalorder %s18, 0
    %p79 = por %p77, %p78
    %p80 = scmp.ne.s32.totalorder %s66, %s67
    %p81 = scmp.eq.s32.totalorder %s19, 1
    %p82 = por %p80, %p81
    %p84 = scmp.ne.s32.totalorder %s67, %s83
    %p85 = scmp.eq.s32.totalorder %s19, 0
    %p86 = por %p84, %p85
    %s88 = sadd.s32 %s87, 1
    %p91 = scmp.eq.s32.totalorder %s13, 1
    %p92 = scmp.ne.s32.totalorder %s87, %s89
    %p93 = scmp.eq.s32.totalorder %s13, 0
    %p94 = por %p92, %p93
    %p95 = scmp.ne.s32.totalorder %s87, %s89
    %p96 = scmp.eq.s32.totalorder %s18, 1
    %p97 = por %p95, %p96
    %p98 = scmp.ne.s32.totalorder %s89, %s90
    %p99 = scmp.eq.s32.totalorder %s18, 0
    %p100 = por %p98, %p99
    %p101 = scmp.ne.s32.totalorder %s89, %s90
    %p102 = scmp.eq.s32.totalorder %s19, 1
    %p103 = por %p101, %p102
    %p105 = scmp.ne.s32.totalorder %s90, %s104
    %p106 = scmp.eq.s32.totalorder %s19, 0
    %p107 = por %p105, %p106
    %s109 = sadd.s32 %s108, 1
    %p112 = scmp.eq.s32.totalorder %s13, 1
    %p113 = scmp.ne.s32.totalorder %s108, %s110
    %p114 = scmp.eq.s32.totalorder %s13, 0
    %p115 = por %p113, %p114
    %p116 = scmp.ne.s32.totalorder %s108, %s110
    %p117 = scmp.eq.s32.totalorder %s18, 1
    %p118 = por %p116, %p117
    %p119 = scmp.ne.s32.totalorder %s110, %s111
    %p120 = scmp.eq.s32.totalorder %s18, 0
    %p121 = por %p119, %p120
    %p122 = scmp.ne.s32.totalorder %s110, %s111
    %p123 = scmp.eq.s32.totalorder %s19, 1
    %p124 = por %p122, %p123
    %p126 = scmp.ne.s32.totalorder %s111, %s125
    %p127 = scmp.eq.s32.totalorder %s19, 0
    %p128 = por %p126, %p127
    %s130 = sadd.s32 %s129, 1
    %p133 = scmp.eq.s32.totalorder %s13, 1
    %p134 = scmp.ne.s32.totalorder %s129, %s131
    %p135 = scmp.eq.s32.totalorder %s13, 0
    %p136 = por %p134, %p135
    %p137 = scmp.ne.s32.totalorder %s129, %s131
    %p138 = scmp.eq.s32.totalorder %s18, 1
    %p139 = por %p137, %p138
    %p140 = scmp.ne.s32.totalorder %s131, %s132
    %p141 = scmp.eq.s32.totalorder %s18, 0
    %p142 = por %p140, %p141
    %p143 = scmp.ne.s32.totalorder %s131, %s132
    %p144 = scmp.eq.s32.totalorder %s19, 1
    %p145 = por %p143, %p144
    %p147 = scmp.ne.s32.totalorder %s132, %s146
    %p148 = scmp.eq.s32.totalorder %s19, 0
    %p149 = por %p147, %p148
    %s151 = sadd.s32 %s150, 1
    %p154 = scmp.eq.s32.totalorder %s13, 1
    %p155 = scmp.ne.s32.totalorder %s150, %s152
    %p156 = scmp.eq.s32.totalorder %s13, 0
    %p157 = por %p155, %p156
    %p158 = scmp.ne.s32.totalorder %s150, %s152
    %p159 = scmp.eq.s32.totalorder %s18, 1
    %p160 = por %p158, %p159
    %p161 = scmp.ne.s32.totalorder %s152, %s153
    %p162 = scmp.eq.s32.totalorder %s18, 0
    %p163 = por %p161, %p162
    %p164 = scmp.ne.s32.totalorder %s152, %s153
    %p165 = scmp.eq.s32.totalorder %s19, 1
    %p166 = por %p164, %p165
    %p168 = scmp.ne.s32.totalorder %s153, %s167
    %p169 = scmp.eq.s32.totalorder %s19, 0
    %p170 = por %p168, %p169
    %s172 = sadd.s32 %s171, 1
    %p175 = scmp.eq.s32.totalorder %s13, 1
    %p176 = scmp.ne.s32.totalorder %s171, %s173
    %p177 = scmp.eq.s32.totalorder %s13, 0
    %p178 = por %p176, %p177
    %p179 = scmp.ne.s32.totalorder %s171, %s173
    %p180 = scmp.eq.s32.totalorder %s18, 1
    %p181 = por %p179, %p180
    %p182 = scmp.ne.s32.totalorder %s173, %s174
    %p183 = scmp.eq.s32.totalorder %s18, 0
    %p184 = por %p182, %p183
    %p185 = scmp.ne.s32.totalorder %s173, %s174
    %p186 = scmp.eq.s32.totalorder %s19, 1
    %p187 = por %p185, %p186
    %p189 = scmp.ne.s32.totalorder %s174, %s188
    %p190 = scmp.eq.s32.totalorder %s19, 0
    %p191 = por %p189, %p190
    %s192 = ssub.s32 %s20, %s32
    %p193 = scmp.eq.s32.totalorder %s192, 0
    %s195 = sadd.s32 %s194, 1
    %s196 = scalar_select %p193, %s194, %s195
    %p199 = pneg %p193
    %p200 = scmp.eq.s32.totalorder %s13, 1
    %p201 = por %p199, %p200
    %p202 = scmp.ne.s32.totalorder %s194, %s197
    %p203 = scmp.eq.s32.totalorder %s13, 0
    %p204 = por %p202, %p203
    %p205 = scmp.ne.s32.totalorder %s194, %s197
    %p206 = scmp.eq.s32.totalorder %s18, 1
    %p207 = por %p205, %p206
    %p208 = scmp.ne.s32.totalorder %s197, %s198
    %p209 = scmp.eq.s32.totalorder %s18, 0
    %p210 = por %p208, %p209
    %p211 = scmp.ne.s32.totalorder %s197, %s198
    %p212 = scmp.eq.s32.totalorder %s19, 1
    %p213 = por %p211, %p212
    %p215 = scmp.ne.s32.totalorder %s198, %s214
    %p216 = scmp.eq.s32.totalorder %s19, 0
    %p217 = por %p215, %p216
    %p218 = scmp.le.s32.totalorder 1, %s13
    %p219 = scmp.lt.s32.totalorder %s13, 3
    %p220 = pnand %p218, %p219
    %p221 = pneg %p220
    // Predicated region
    $region9: #{_rcnn_forward.3} parent=5 // pred_check
      _
    $region10: #{_rcnn_forward.3} parent=5 // pred_check_branch
      %223 = sbr.rel (%p220) target = $region12
    $region11: #{_rcnn_forward.3} parent=5 // pred_region
      %s224 = ssub.s32 %s13, 1
      // Predicated region
      $region13: #{_rcnn_forward.3} parent=11 // pred_check
        %p225 = pneg %p100
      $region14: #{_rcnn_forward.3} parent=11 // pred_check_branch
        %227 = sbr.rel (%p225) target = $region16
      $region15: #{_rcnn_forward.3} parent=11 // pred_region
        _
      $region16: #{_rcnn_forward.3} parent=11 // pred_fallthru
        _
      // Predicated region
      $region17: #{_rcnn_forward.3} parent=11 // pred_check
        %p228 = pneg %p121
      $region18: #{_rcnn_forward.3} parent=11 // pred_check_branch
        %230 = sbr.rel (%p228) target = $region20
      $region19: #{_rcnn_forward.3} parent=11 // pred_region
        _
      $region20: #{_rcnn_forward.3} parent=11 // pred_fallthru
        _
      // Predicated region
      $region21: #{_rcnn_forward.3} parent=11 // pred_check
        %p231 = pneg %p142
      $region22: #{_rcnn_forward.3} parent=11 // pred_check_branch
        %233 = sbr.rel (%p231) target = $region24
      $region23: #{_rcnn_forward.3} parent=11 // pred_region
        _
      $region24: #{_rcnn_forward.3} parent=11 // pred_fallthru
        _
      // Predicated region
      $region25: #{_rcnn_forward.3} parent=11 // pred_check
        %p234 = pneg %p163
      $region26: #{_rcnn_forward.3} parent=11 // pred_check_branch
        %236 = sbr.rel (%p234) target = $region28
      $region27: #{_rcnn_forward.3} parent=11 // pred_region
        _
      $region28: #{_rcnn_forward.3} parent=11 // pred_fallthru
        _
      // Predicated region
      $region29: #{_rcnn_forward.3} parent=11 // pred_check
        %p237 = pneg %p184
      $region30: #{_rcnn_forward.3} parent=11 // pred_check_branch
        %239 = sbr.rel (%p237) target = $region32
      $region31: #{_rcnn_forward.3} parent=11 // pred_region
        _
      $region32: #{_rcnn_forward.3} parent=11 // pred_fallthru
        _
    $region12: #{_rcnn_forward.3} parent=5 // pred_fallthru
      _
    %p240 = scmp.lt.s32.totalorder %s13, 2
    // Predicated region
    $region33: #{_rcnn_forward.3} parent=5 // pred_check
      %p241 = pneg %p240
    $region34: #{_rcnn_forward.3} parent=5 // pred_check_branch
      %243 = sbr.rel (%p241) target = $region36
    $region35: #{_rcnn_forward.3} parent=5 // pred_region
      // Predicated region
      $region37: #{_rcnn_forward.3} parent=35 // pred_check
        %p244 = pneg %p47
      $region38: #{_rcnn_forward.3} parent=35 // pred_check_branch
        %246 = sbr.rel (%p244) target = $region40
      $region39: #{_rcnn_forward.3} parent=35 // pred_region
        %s247 = smul.u32 4, %s21
        %p248 = scmp.lt.s32.totalorder %s20, 0
        %s249 = scalar_select %p248, %s20, 0
        %p250 = scmp.lt.s32.totalorder %s247, 7
        %s251 = scalar_select %p250, %s247, 7
        %s252 = smul.addr %s249, 8
        %s253 = sadd.s32 %s251, %s252
        %s254 = smul.addr %s253, 4
        %s255 = scalar_lea.vmem %s0, %s254
        %s256 = smul.u32 4, %s21
      $region40: #{_rcnn_forward.3} parent=35 // pred_fallthru
        _
      // Predicated region
      $region41: #{_rcnn_forward.3} parent=35 // pred_check
        %p257 = pneg %p73
      $region42: #{_rcnn_forward.3} parent=35 // pred_check_branch
        %259 = sbr.rel (%p257) target = $region44
      $region43: #{_rcnn_forward.3} parent=35 // pred_region
        %s260 = smul.u32 64, %s21
        %p261 = scmp.lt.s32.totalorder %s260, 127
        %s262 = scalar_select %p261, %s260, 127
        %s263 = smul.addr %s262, 4
        %s264 = scalar_lea.vmem %s1, %s263
        %s265 = smul.u32 64, %s21
      $region44: #{_rcnn_forward.3} parent=35 // pred_fallthru
        _
    $region36: #{_rcnn_forward.3} parent=5 // pred_fallthru
      _
    %p266 = scmp.le.s32.totalorder 1, %s13
    %p267 = scmp.lt.s32.totalorder %s13, 3
    %p268 = pnand %p266, %p267
    %p269 = pneg %p268
    // Predicated region
    $region45: #{_rcnn_forward.3} parent=5 // pred_check
      _
    $region46: #{_rcnn_forward.3} parent=5 // pred_check_branch
      %271 = sbr.rel (%p268) target = $region48
    $region47: #{_rcnn_forward.3} parent=5 // pred_region
      %s272 = ssub.s32 %s13, 1
      %s273 = smul.u32 4, %s23
      %p274 = scmp.lt.s32.totalorder %s22, 0
      %s275 = scalar_select %p274, %s22, 0
      %p276 = scmp.lt.s32.totalorder %s273, 7
      %s277 = scalar_select %p276, %s273, 7
      %s278 = smul.addr %s275, 8
      %s279 = sadd.s32 %s277, %s278
      %s280 = smul.addr %s279, 4
      %s281 = scalar_lea.vmem %s0, %s280
      %p282 = pneg %p53
      %p283 = pneg %p50
      %s284 = smul.u32 64, %s23
      %p285 = scmp.lt.s32.totalorder %s284, 127
      %s286 = scalar_select %p285, %s284, 127
      %s287 = smul.addr %s286, 4
      %s288 = scalar_lea.vmem %s1, %s287
      %p289 = pneg %p79
      %p290 = pneg %p76
      %p291 = pneg %p100
      %p292 = pneg %p97
      %p293 = pneg %p121
      %p294 = pneg %p118
      %p295 = pneg %p142
      %p296 = pneg %p139
      %p297 = pneg %p163
      %p298 = pneg %p160
      %p299 = pneg %p184
      %p300 = pneg %p181
      %p301 = pneg %p210
      %p302 = pneg %p207
      %p303 = scmp.lt.s32.totalorder %s22, 0
      %s304 = scalar_select %p303, %s22, 0
      %s305 = smul.addr %s304, 8
      %s306 = scalar_lea.vmem %s7, %s305
      %s307 = smul.u32 4, %s23
      %p308 = scmp.lt.s32.totalorder %s22, 0
      %s309 = scalar_select %p308, %s22, 0
      %p310 = scmp.lt.s32.totalorder %s307, 7
      %s311 = scalar_select %p310, %s307, 7
      %s312 = smul.addr %s309, 8
      %s313 = sadd.s32 %s311, %s312
      %s314 = smul.addr %s313, 4
      %s315 = scalar_lea.vmem %s0, %s314
      %s316 = smul.u32 4, %s23
      %s317 = smul.u32 64, %s23
      %p318 = scmp.lt.s32.totalorder %s317, 127
      %s319 = scalar_select %p318, %s317, 127
      %s320 = smul.addr %s319, 4
      %s321 = scalar_lea.vmem %s1, %s320
      %s322 = smul.u32 64, %s23
      %p323 = scmp.lt.s32.totalorder %s22, 0
      %s324 = scalar_select %p323, %s22, 0
      %s325 = smul.addr %s324, 8
      %s326 = scalar_lea.vmem %s7, %s325
      %p328 = scmp.eq.s32.totalorder %s23, 0
      // Predicated region
      $region49: #{_rcnn_forward.3} parent=47 // pred_check
        %p329 = pneg %p328
      $region50: #{_rcnn_forward.3} parent=47 // pred_check_branch
        %331 = sbr.rel (%p329) target = $region52
      $region51: #{_rcnn_forward.3} parent=47 // pred_region
        %332 = vst [vmem:[#allocation2] sm:$0xff] 0.0
      $region52: #{_rcnn_forward.3} parent=47 // pred_fallthru
        _
      %v333 = vld [vmem:[#allocation2] sm:$0xff]
      %v334 = vld [vmem:[%s315] sm:$0xff]
      %v335 = vld [vmem:[%s315 + $0x8] sm:$0xff]
      %v336 = vld [vmem:[%s321] sm:$0xf]
      %v337 = vld [vmem:[%s321 + $0x4] sm:$0xf]
      %v338 = vld [vmem:[%s321 + $0x8] sm:$0xf]
      %v339 = vld [vmem:[%s321 + $0xc] sm:$0xf]
      %v340 = vld [vmem:[%s321 + $0x10] sm:$0xf]
      %v341 = vld [vmem:[%s321 + $0x14] sm:$0xf]
      %v342 = vld [vmem:[%s321 + $0x18] sm:$0xf]
      %v343 = vld [vmem:[%s321 + $0x1c] sm:$0xf]
      %v344 = vld [vmem:[%s321 + $0x20] sm:$0xf]
      %v345 = vld [vmem:[%s321 + $0x24] sm:$0xf]
      %v346 = vld [vmem:[%s321 + $0x28] sm:$0xf]
      %v347 = vld [vmem:[%s321 + $0x2c] sm:$0xf]
      %v348 = vld [vmem:[%s321 + $0x30] sm:$0xf]
      %v349 = vld [vmem:[%s321 + $0x34] sm:$0xf]
      %v350 = vld [vmem:[%s321 + $0x38] sm:$0xf]
      %v351 = vld [vmem:[%s321 + $0x3c] sm:$0xf]
      %v352 = vld [vmem:[%s321 + $0x40] sm:$0xf]
      %v353 = vld [vmem:[%s321 + $0x44] sm:$0xf]
      %v354 = vld [vmem:[%s321 + $0x48] sm:$0xf]
      %v355 = vld [vmem:[%s321 + $0x4c] sm:$0xf]
      %v356 = vld [vmem:[%s321 + $0x50] sm:$0xf]
      %v357 = vld [vmem:[%s321 + $0x54] sm:$0xf]
      %v358 = vld [vmem:[%s321 + $0x58] sm:$0xf]
      %v359 = vld [vmem:[%s321 + $0x5c] sm:$0xf]
      %v360 = vld [vmem:[%s321 + $0x60] sm:$0xf]
      %v361 = vld [vmem:[%s321 + $0x64] sm:$0xf]
      %v362 = vld [vmem:[%s321 + $0x68] sm:$0xf]
      %v363 = vld [vmem:[%s321 + $0x6c] sm:$0xf]
      %v364 = vld [vmem:[%s321 + $0x70] sm:$0xf]
      %v365 = vld [vmem:[%s321 + $0x74] sm:$0xf]
      %v366 = vld [vmem:[%s321 + $0x78] sm:$0xf]
      %v367 = vld [vmem:[%s321 + $0x7c] sm:$0xf]
      %v368 = vld [vmem:[%s321 + $0x80] sm:$0xf]
      %v369 = vld [vmem:[%s321 + $0x84] sm:$0xf]
      %v370 = vld [vmem:[%s321 + $0x88] sm:$0xf]
      %v371 = vld [vmem:[%s321 + $0x8c] sm:$0xf]
      %v372 = vld [vmem:[%s321 + $0x90] sm:$0xf]
      %v373 = vld [vmem:[%s321 + $0x94] sm:$0xf]
      %v374 = vld [vmem:[%s321 + $0x98] sm:$0xf]
      %v375 = vld [vmem:[%s321 + $0x9c] sm:$0xf]
      %v376 = vld [vmem:[%s321 + $0xa0] sm:$0xf]
      %v377 = vld [vmem:[%s321 + $0xa4] sm:$0xf]
      %v378 = vld [vmem:[%s321 + $0xa8] sm:$0xf]
      %v379 = vld [vmem:[%s321 + $0xac] sm:$0xf]
      %v380 = vld [vmem:[%s321 + $0xb0] sm:$0xf]
      %v381 = vld [vmem:[%s321 + $0xb4] sm:$0xf]
      %v382 = vld [vmem:[%s321 + $0xb8] sm:$0xf]
      %v383 = vld [vmem:[%s321 + $0xbc] sm:$0xf]
      %v384 = vld [vmem:[%s321 + $0xc0] sm:$0xf]
      %v385 = vld [vmem:[%s321 + $0xc4] sm:$0xf]
      %v386 = vld [vmem:[%s321 + $0xc8] sm:$0xf]
      %v387 = vld [vmem:[%s321 + $0xcc] sm:$0xf]
      %v388 = vld [vmem:[%s321 + $0xd0] sm:$0xf]
      %v389 = vld [vmem:[%s321 + $0xd4] sm:$0xf]
      %v390 = vld [vmem:[%s321 + $0xd8] sm:$0xf]
      %v391 = vld [vmem:[%s321 + $0xdc] sm:$0xf]
      %v392 = vld [vmem:[%s321 + $0xe0] sm:$0xf]
      %v393 = vld [vmem:[%s321 + $0xe4] sm:$0xf]
      %v394 = vld [vmem:[%s321 + $0xe8] sm:$0xf]
      %v395 = vld [vmem:[%s321 + $0xec] sm:$0xf]
      %v396 = vld [vmem:[%s321 + $0xf0] sm:$0xf]
      %v397 = vld [vmem:[%s321 + $0xf4] sm:$0xf]
      %v398 = vld [vmem:[%s321 + $0xf8] sm:$0xf]
      %v399 = vld [vmem:[%s321 + $0xfc] sm:$0xf]
      %v402 = vunpack.c.l.b16 %v334
      %v403 = vunpack.c.h.b16 %v334
      %v404 = vunpack.c.l.b16 %v335
      %v405 = vunpack.c.h.b16 %v335
      %v406 = vpack.c.b16 %v402, %v402
      %v407 = vpack.c.b16 %v403, %v403
      %v408 = vpack.c.b16 %v404, %v404
      %v409 = vpack.c.b16 %v405, %v405
      %v478 = vunpack.c.l.b16 %v336
      %v479 = vunpack.c.l.b16 %v337
      %v480 = vunpack.c.l.b16 %v338
      %v481 = vunpack.c.l.b16 %v339
      %v482 = vunpack.c.l.b16 %v340
      %v483 = vunpack.c.l.b16 %v341
      %v484 = vunpack.c.l.b16 %v342
      %v485 = vunpack.c.l.b16 %v343
      %v486 = vunpack.c.l.b16 %v344
      %v487 = vunpack.c.l.b16 %v345
      %v488 = vunpack.c.l.b16 %v346
      %v489 = vunpack.c.l.b16 %v347
      %v490 = vunpack.c.l.b16 %v348
      %v491 = vunpack.c.l.b16 %v349
      %v492 = vunpack.c.l.b16 %v350
      %v493 = vunpack.c.l.b16 %v351
      %v494 = vunpack.c.l.b16 %v352
      %v495 = vunpack.c.l.b16 %v353
      %v496 = vunpack.c.l.b16 %v354
      %v497 = vunpack.c.l.b16 %v355
      %v498 = vunpack.c.l.b16 %v356
      %v499 = vunpack.c.l.b16 %v357
      %v500 = vunpack.c.l.b16 %v358
      %v501 = vunpack.c.l.b16 %v359
      %v502 = vunpack.c.l.b16 %v360
      %v503 = vunpack.c.l.b16 %v361
      %v504 = vunpack.c.l.b16 %v362
      %v505 = vunpack.c.l.b16 %v363
      %v506 = vunpack.c.l.b16 %v364
      %v507 = vunpack.c.l.b16 %v365
      %v508 = vunpack.c.l.b16 %v366
      %v509 = vunpack.c.l.b16 %v367
      %v510 = vunpack.c.l.b16 %v368
      %v511 = vunpack.c.l.b16 %v369
      %v512 = vunpack.c.l.b16 %v370
      %v513 = vunpack.c.l.b16 %v371
      %v514 = vunpack.c.l.b16 %v372
      %v515 = vunpack.c.l.b16 %v373
      %v516 = vunpack.c.l.b16 %v374
      %v517 = vunpack.c.l.b16 %v375
      %v518 = vunpack.c.l.b16 %v376
      %v519 = vunpack.c.l.b16 %v377
      %v520 = vunpack.c.l.b16 %v378
      %v521 = vunpack.c.l.b16 %v379
      %v522 = vunpack.c.l.b16 %v380
      %v523 = vunpack.c.l.b16 %v381
      %v524 = vunpack.c.l.b16 %v382
      %v525 = vunpack.c.l.b16 %v383
      %v526 = vunpack.c.l.b16 %v384
      %v527 = vunpack.c.l.b16 %v385
      %v528 = vunpack.c.l.b16 %v386
      %v529 = vunpack.c.l.b16 %v387
      %v530 = vunpack.c.l.b16 %v388
      %v531 = vunpack.c.l.b16 %v389
      %v532 = vunpack.c.l.b16 %v390
      %v533 = vunpack.c.l.b16 %v391
      %v534 = vunpack.c.l.b16 %v392
      %v535 = vunpack.c.l.b16 %v393
      %v536 = vunpack.c.l.b16 %v394
      %v537 = vunpack.c.l.b16 %v395
      %v538 = vunpack.c.l.b16 %v396
      %v539 = vunpack.c.l.b16 %v397
      %v540 = vunpack.c.l.b16 %v398
      %v541 = vunpack.c.l.b16 %v399
      %v542 = vpack.c.b16 %v479, %v478
      %v543 = vpack.c.b16 %v481, %v480
      %v544 = vpack.c.b16 %v483, %v482
      %v545 = vpack.c.b16 %v485, %v484
      %v546 = vpack.c.b16 %v487, %v486
      %v547 = vpack.c.b16 %v489, %v488
      %v548 = vpack.c.b16 %v491, %v490
      %v549 = vpack.c.b16 %v493, %v492
      %v550 = vpack.c.b16 %v495, %v494
      %v551 = vpack.c.b16 %v497, %v496
      %v552 = vpack.c.b16 %v499, %v498
      %v553 = vpack.c.b16 %v501, %v500
      %v554 = vpack.c.b16 %v503, %v502
      %v555 = vpack.c.b16 %v505, %v504
      %v556 = vpack.c.b16 %v507, %v506
      %v557 = vpack.c.b16 %v509, %v508
      %v558 = vpack.c.b16 %v511, %v510
      %v559 = vpack.c.b16 %v513, %v512
      %v560 = vpack.c.b16 %v515, %v514
      %v561 = vpack.c.b16 %v517, %v516
      %v562 = vpack.c.b16 %v519, %v518
      %v563 = vpack.c.b16 %v521, %v520
      %v564 = vpack.c.b16 %v523, %v522
      %v565 = vpack.c.b16 %v525, %v524
      %v566 = vpack.c.b16 %v527, %v526
      %v567 = vpack.c.b16 %v529, %v528
      %v568 = vpack.c.b16 %v531, %v530
      %v569 = vpack.c.b16 %v533, %v532
      %v570 = vpack.c.b16 %v535, %v534
      %v571 = vpack.c.b16 %v537, %v536
      %v572 = vpack.c.b16 %v539, %v538
      %v573 = vpack.c.b16 %v541, %v540
      %606 = vmatprep.subr.bf16.mxu0 0
      %607 = vmatpush1.bf16.msra.mxu0 %v549
      %608 = vmatprep.subr.bf16.mxu0 0
      %609 = vmatpush1.bf16.msra.mxu0 %v548
      %610 = vmatprep.subr.bf16.mxu0 0
      %611 = vmatpush1.bf16.msra.mxu0 %v547
      %612 = vmatprep.subr.bf16.mxu0 0
      %613 = vmatpush1.bf16.msra.mxu0 %v546
      %614 = vmatprep.subr.bf16.mxu0 0
      %615 = vmatpush1.bf16.msra.mxu0 %v545
      %616 = vmatprep.subr.bf16.mxu0 0
      %617 = vmatpush1.bf16.msra.mxu0 %v544
      %618 = vmatprep.subr.bf16.mxu0 0
      %619 = vmatpush1.bf16.msra.mxu0 %v543
      %620 = vmatprep.subr.bf16.mxu0 0
      %621 = vmatpush1.bf16.msra.mxu0 %v542
      %622 = vmatprep.subr.bf16.mxu0 0
      %623 = vmatpush2.bf16.msra.mxu0 %v557
      %624 = vmatprep.subr.bf16.mxu0 0
      %625 = vmatpush2.bf16.msra.mxu0 %v556
      %626 = vmatprep.subr.bf16.mxu0 0
      %627 = vmatpush2.bf16.msra.mxu0 %v555
      %628 = vmatprep.subr.bf16.mxu0 0
      %629 = vmatpush2.bf16.msra.mxu0 %v554
      %630 = vmatprep.subr.bf16.mxu0 0
      %631 = vmatpush2.bf16.msra.mxu0 %v553
      %632 = vmatprep.subr.bf16.mxu0 0
      %633 = vmatpush2.bf16.msra.mxu0 %v552
      %634 = vmatprep.subr.bf16.mxu0 0
      %635 = vmatpush2.bf16.msra.mxu0 %v551
      %636 = vmatprep.subr.bf16.mxu0 0
      %637 = vmatpush2.bf16.msra.mxu0 %v550
      %638 = vmatprep.mubr.bf16.mxu0 %v407
      %639 = vmatmul.mubr.bf16.gmra.mxu0 %v406
      %v640 = vpop.f32.mrf.mxu0
      %v641 = vadd.f32 0.0, %v640
      %v642 = vpop.f32.mrf.mxu0
      %v643 = vpop.f32.mrf.mxu0
      %v644 = vpop.f32.mrf.mxu0
      %645 = vdwg.mxu0
      %646 = vmatprep.subr.bf16.mxu0 0
      %647 = vmatpush1.bf16.msra.mxu0 %v565
      %648 = vmatprep.subr.bf16.mxu0 0
      %649 = vmatpush1.bf16.msra.mxu0 %v564
      %650 = vmatprep.subr.bf16.mxu0 0
      %651 = vmatpush1.bf16.msra.mxu0 %v563
      %652 = vmatprep.subr.bf16.mxu0 0
      %653 = vmatpush1.bf16.msra.mxu0 %v562
      %654 = vmatprep.subr.bf16.mxu0 0
      %655 = vmatpush1.bf16.msra.mxu0 %v561
      %656 = vmatprep.subr.bf16.mxu0 0
      %657 = vmatpush1.bf16.msra.mxu0 %v560
      %658 = vmatprep.subr.bf16.mxu0 0
      %659 = vmatpush1.bf16.msra.mxu0 %v559
      %660 = vmatprep.subr.bf16.mxu0 0
      %661 = vmatpush1.bf16.msra.mxu0 %v558
      %662 = vmatprep.subr.bf16.mxu0 0
      %663 = vmatpush2.bf16.msra.mxu0 %v573
      %664 = vmatprep.subr.bf16.mxu0 0
      %665 = vmatpush2.bf16.msra.mxu0 %v572
      %666 = vmatprep.subr.bf16.mxu0 0
      %667 = vmatpush2.bf16.msra.mxu0 %v571
      %668 = vmatprep.subr.bf16.mxu0 0
      %669 = vmatpush2.bf16.msra.mxu0 %v570
      %670 = vmatprep.subr.bf16.mxu0 0
      %671 = vmatpush2.bf16.msra.mxu0 %v569
      %672 = vmatprep.subr.bf16.mxu0 0
      %673 = vmatpush2.bf16.msra.mxu0 %v568
      %674 = vmatprep.subr.bf16.mxu0 0
      %675 = vmatpush2.bf16.msra.mxu0 %v567
      %676 = vmatprep.subr.bf16.mxu0 0
      %677 = vmatpush2.bf16.msra.mxu0 %v566
      %678 = vmatprep.mubr.bf16.mxu0 %v409
      %679 = vmatmul.mubr.bf16.gmra.mxu0 %v408
      %v680 = vpop.f32.mrf.mxu0
      %v681 = vadd.f32 %v641, %v680
      %v682 = vpop.f32.mrf.mxu0
      %v683 = vpop.f32.mrf.mxu0
      %v684 = vpop.f32.mrf.mxu0
      %685 = vdwg.mxu0
      %v686 = vadd.f32 %v333, %v681
      %687 = vst [vmem:[#allocation2] sm:$0xff] %v686
      %p688 = scmp.eq.s32.totalorder %s23, 1
      // Predicated region
      $region53: #{_rcnn_forward.3} parent=47 // pred_check
        %p689 = pneg %p688
      $region54: #{_rcnn_forward.3} parent=47 // pred_check_branch
        %691 = sbr.rel (%p689) target = $region56
      $region55: #{_rcnn_forward.3} parent=47 // pred_region
        %v692 = vld [vmem:[#allocation2] sm:$0xff]
        %v693 = vld [vmem:[%s2] sm:$0x1]
        %v695 = vlaneseq
        %v696 = vshrl.u32 %v695, 7
        %v697 = vsub.s32 0, %v696
        %v698 = vrot.slane %v693, %v697
        %v700 = vadd.f32 %v692, %v698
        %v701 = vmax.f32 %v700, 0.0
        %v702 = vpack.c.bf16 %v701, %v701
        %v703 = vld [vmem:[%s3] sm:$0xf]
        %v704 = vld [vmem:[%s3 + $0x4] sm:$0xf]
        %v705 = vld [vmem:[%s3 + $0x8] sm:$0xf]
        %v706 = vld [vmem:[%s3 + $0xc] sm:$0xf]
        %v707 = vld [vmem:[%s3 + $0x10] sm:$0xf]
        %v708 = vld [vmem:[%s3 + $0x14] sm:$0xf]
        %v709 = vld [vmem:[%s3 + $0x18] sm:$0xf]
        %v710 = vld [vmem:[%s3 + $0x1c] sm:$0xf]
        %v711 = vld [vmem:[%s3 + $0x20] sm:$0xf]
        %v712 = vld [vmem:[%s3 + $0x24] sm:$0xf]
        %v713 = vld [vmem:[%s3 + $0x28] sm:$0xf]
        %v714 = vld [vmem:[%s3 + $0x2c] sm:$0xf]
        %v715 = vld [vmem:[%s3 + $0x30] sm:$0xf]
        %v716 = vld [vmem:[%s3 + $0x34] sm:$0xf]
        %v717 = vld [vmem:[%s3 + $0x38] sm:$0xf]
        %v718 = vld [vmem:[%s3 + $0x3c] sm:$0xf]
        %v719 = vld [vmem:[%s4] sm:$0x1]
        %v721 = vlaneseq
        %v722 = vshrl.u32 %v721, 7
        %v723 = vsub.s32 0, %v722
        %v724 = vrot.slane %v719, %v723
        %v742 = vunpack.c.l.b16 %v703
        %v743 = vunpack.c.l.b16 %v704
        %v744 = vunpack.c.l.b16 %v705
        %v745 = vunpack.c.l.b16 %v706
        %v746 = vunpack.c.l.b16 %v707
        %v747 = vunpack.c.l.b16 %v708
        %v748 = vunpack.c.l.b16 %v709
        %v749 = vunpack.c.l.b16 %v710
        %v750 = vunpack.c.l.b16 %v711
        %v751 = vunpack.c.l.b16 %v712
        %v752 = vunpack.c.l.b16 %v713
        %v753 = vunpack.c.l.b16 %v714
        %v754 = vunpack.c.l.b16 %v715
        %v755 = vunpack.c.l.b16 %v716
        %v756 = vunpack.c.l.b16 %v717
        %v757 = vunpack.c.l.b16 %v718
        %v758 = vpack.c.b16 %v743, %v742
        %v759 = vpack.c.b16 %v745, %v744
        %v760 = vpack.c.b16 %v747, %v746
        %v761 = vpack.c.b16 %v749, %v748
        %v762 = vpack.c.b16 %v751, %v750
        %v763 = vpack.c.b16 %v753, %v752
        %v764 = vpack.c.b16 %v755, %v754
        %v765 = vpack.c.b16 %v757, %v756
        %774 = vmatprep.subr.bf16.mxu0 0
        %775 = vmatpush1.bf16.msra.mxu0 %v765
        %776 = vmatprep.subr.bf16.mxu0 0
        %777 = vmatpush1.bf16.msra.mxu0 %v764
        %778 = vmatprep.subr.bf16.mxu0 0
        %779 = vmatpush1.bf16.msra.mxu0 %v763
        %780 = vmatprep.subr.bf16.mxu0 0
        %781 = vmatpush1.bf16.msra.mxu0 %v762
        %782 = vmatprep.subr.bf16.mxu0 0
        %783 = vmatpush1.bf16.msra.mxu0 %v761
        %784 = vmatprep.subr.bf16.mxu0 0
        %785 = vmatpush1.bf16.msra.mxu0 %v760
        %786 = vmatprep.subr.bf16.mxu0 0
        %787 = vmatpush1.bf16.msra.mxu0 %v759
        %788 = vmatprep.subr.bf16.mxu0 0
        %789 = vmatpush1.bf16.msra.mxu0 %v758
        %790 = vmatprep.subr.bf16.mxu0 0
        %791 = vmatpush2.bf16.msra.mxu0 0
        %792 = vmatprep.subr.bf16.mxu0 0
        %793 = vmatpush2.bf16.msra.mxu0 0
        %794 = vmatprep.subr.bf16.mxu0 0
        %795 = vmatpush2.bf16.msra.mxu0 0
        %796 = vmatprep.subr.bf16.mxu0 0
        %797 = vmatpush2.bf16.msra.mxu0 0
        %798 = vmatprep.subr.bf16.mxu0 0
        %799 = vmatpush2.bf16.msra.mxu0 0
        %800 = vmatprep.subr.bf16.mxu0 0
        %801 = vmatpush2.bf16.msra.mxu0 0
        %802 = vmatprep.subr.bf16.mxu0 0
        %803 = vmatpush2.bf16.msra.mxu0 0
        %804 = vmatprep.subr.bf16.mxu0 0
        %805 = vmatpush2.bf16.msra.mxu0 0
        %806 = vmatprep.mubr.bf16.mxu0 0
        %807 = vmatmul.mubr.bf16.gmra.mxu0 %v702
        %v808 = vpop.f32.mrf.mxu0
        %v809 = vadd.f32 %v724, %v808
        %v810 = vpop.f32.mrf.mxu0
        %v811 = vpop.f32.mrf.mxu0
        %v812 = vpop.f32.mrf.mxu0
        %813 = vdwg.mxu0
        %v814 = vmax.f32 %v809, 0.0
        %v815 = vpack.c.bf16 %v814, %v814
        %v816 = vld [vmem:[%s5] sm:$0xf]
        %v817 = vld [vmem:[%s5 + $0x4] sm:$0xf]
        %v818 = vld [vmem:[%s5 + $0x8] sm:$0xf]
        %v819 = vld [vmem:[%s5 + $0xc] sm:$0xf]
        %v820 = vld [vmem:[%s5 + $0x10] sm:$0xf]
        %v821 = vld [vmem:[%s5 + $0x14] sm:$0xf]
        %v822 = vld [vmem:[%s5 + $0x18] sm:$0xf]
        %v823 = vld [vmem:[%s5 + $0x1c] sm:$0xf]
        %v824 = vld [vmem:[%s5 + $0x20] sm:$0xf]
        %v825 = vld [vmem:[%s5 + $0x24] sm:$0xf]
        %v826 = vld [vmem:[%s5 + $0x28] sm:$0xf]
        %v827 = vld [vmem:[%s5 + $0x2c] sm:$0xf]
        %v828 = vld [vmem:[%s5 + $0x30] sm:$0xf]
        %v829 = vld [vmem:[%s5 + $0x34] sm:$0xf]
        %v830 = vld [vmem:[%s5 + $0x38] sm:$0xf]
        %v831 = vld [vmem:[%s5 + $0x3c] sm:$0xf]
        %v832 = vld [vmem:[%s6] sm:$0x1]
        %v834 = vlaneseq
        %v835 = vshrl.u32 %v834, 7
        %v836 = vsub.s32 0, %v835
        %v837 = vrot.slane %v832, %v836
        %v855 = vunpack.c.l.b16 %v816
        %v856 = vunpack.c.l.b16 %v817
        %v857 = vunpack.c.l.b16 %v818
        %v858 = vunpack.c.l.b16 %v819
        %v859 = vunpack.c.l.b16 %v820
        %v860 = vunpack.c.l.b16 %v821
        %v861 = vunpack.c.l.b16 %v822
        %v862 = vunpack.c.l.b16 %v823
        %v863 = vunpack.c.l.b16 %v824
        %v864 = vunpack.c.l.b16 %v825
        %v865 = vunpack.c.l.b16 %v826
        %v866 = vunpack.c.l.b16 %v827
        %v867 = vunpack.c.l.b16 %v828
        %v868 = vunpack.c.l.b16 %v829
        %v869 = vunpack.c.l.b16 %v830
        %v870 = vunpack.c.l.b16 %v831
        %v871 = vpack.c.b16 %v856, %v855
        %v872 = vpack.c.b16 %v858, %v857
        %v873 = vpack.c.b16 %v860, %v859
        %v874 = vpack.c.b16 %v862, %v861
        %v875 = vpack.c.b16 %v864, %v863
        %v876 = vpack.c.b16 %v866, %v865
        %v877 = vpack.c.b16 %v868, %v867
        %v878 = vpack.c.b16 %v870, %v869
        %887 = vmatprep.subr.bf16.mxu0 0
        %888 = vmatpush1.bf16.msra.mxu0 %v878
        %889 = vmatprep.subr.bf16.mxu0 0
        %890 = vmatpush1.bf16.msra.mxu0 %v877
        %891 = vmatprep.subr.bf16.mxu0 0
        %892 = vmatpush1.bf16.msra.mxu0 %v876
        %893 = vmatprep.subr.bf16.mxu0 0
        %894 = vmatpush1.bf16.msra.mxu0 %v875
        %895 = vmatprep.subr.bf16.mxu0 0
        %896 = vmatpush1.bf16.msra.mxu0 %v874
        %897 = vmatprep.subr.bf16.mxu0 0
        %898 = vmatpush1.bf16.msra.mxu0 %v873
        %899 = vmatprep.subr.bf16.mxu0 0
        %900 = vmatpush1.bf16.msra.mxu0 %v872
        %901 = vmatprep.subr.bf16.mxu0 0
        %902 = vmatpush1.bf16.msra.mxu0 %v871
        %903 = vmatprep.subr.bf16.mxu0 0
        %904 = vmatpush2.bf16.msra.mxu0 0
        %905 = vmatprep.subr.bf16.mxu0 0
        %906 = vmatpush2.bf16.msra.mxu0 0
        %907 = vmatprep.subr.bf16.mxu0 0
        %908 = vmatpush2.bf16.msra.mxu0 0
        %909 = vmatprep.subr.bf16.mxu0 0
        %910 = vmatpush2.bf16.msra.mxu0 0
        %911 = vmatprep.subr.bf16.mxu0 0
        %912 = vmatpush2.bf16.msra.mxu0 0
        %913 = vmatprep.subr.bf16.mxu0 0
        %914 = vmatpush2.bf16.msra.mxu0 0
        %915 = vmatprep.subr.bf16.mxu0 0
        %916 = vmatpush2.bf16.msra.mxu0 0
        %917 = vmatprep.subr.bf16.mxu0 0
        %918 = vmatpush2.bf16.msra.mxu0 0
        %919 = vmatprep.mubr.bf16.mxu0 0
        %920 = vmatmul.mubr.bf16.gmra.mxu0 %v815
        %v921 = vpop.f32.mrf.mxu0
        %v922 = vadd.f32 %v837, %v921
        %v923 = vpop.f32.mrf.mxu0
        %v924 = vpop.f32.mrf.mxu0
        %v925 = vpop.f32.mrf.mxu0
        %926 = vdwg.mxu0
        %v927 = vlaneseq
        %v928 = vand.u32 %v927, 127
        %vm929 = vcmp.lt.s32.totalorder %v928, 2
        %v930 = vsel %vm929, %v922, -1e+30
        %931 = vmax.xlane.f32.xlu0 %v930
        %v932 = vpop.xlane.xlu0 %931
        %v933 = vsub.f32 %v930, %v932
        %v934 = vmul.f32 %v933, 1.442695
        %v935 = vpow.pop %v934
        %v936 = vsel %vm929, %v935, 0.0
        %937 = vadd.xlane.f32.xlu0 %v936
        %v938 = vpop.xlane.xlu0 %937
        %v939 = vrcp.pop %v938
        %v940 = vmul.f32 %v936, %v939
        %v941 = vsel %vm929, %v940, %v922
        %942 = vst [vmem:[%s326] sm:$0xff] %v941
      $region56: #{_rcnn_forward.3} parent=47 // pred_fallthru
        _
      %p943 = scmp.lt.s32.totalorder %s22, 0
      %s944 = scalar_select %p943, %s22, 0
      %s945 = smul.addr %s944, 8
      %s946 = scalar_lea.vmem %s7, %s945
      // Predicated region
      $region57: #{_rcnn_forward.3} parent=47 // pred_check
        %p947 = pneg %p207
      $region58: #{_rcnn_forward.3} parent=47 // pred_check_branch
        %949 = sbr.rel (%p947) target = $region60
      $region59: #{_rcnn_forward.3} parent=47 // pred_region
        _
      $region60: #{_rcnn_forward.3} parent=47 // pred_fallthru
        _
      // Predicated region
      $region61: #{_rcnn_forward.3} parent=47 // pred_check
        %p950 = pneg %p207
      $region62: #{_rcnn_forward.3} parent=47 // pred_check_branch
        %952 = sbr.rel (%p950) target = $region64
      $region63: #{_rcnn_forward.3} parent=47 // pred_region
        %p953 = scmp.lt.s32.totalorder %s22, 0
        %s954 = scalar_select %p953, %s22, 0
        %s955 = smul.addr %s954, 8
        %s956 = scalar_lea.vmem %s7, %s955
      $region64: #{_rcnn_forward.3} parent=47 // pred_fallthru
        _
    $region48: #{_rcnn_forward.3} parent=5 // pred_fallthru
      _
    %p957 = scmp.le.s32.totalorder 2, %s13
    // Predicated region
    $region65: #{_rcnn_forward.3} parent=5 // pred_check
      %p958 = pneg %p957
    $region66: #{_rcnn_forward.3} parent=5 // pred_check_branch
      %960 = sbr.rel (%p958) target = $region68
    $region67: #{_rcnn_forward.3} parent=5 // pred_region
      %s961 = ssub.s32 %s13, 2
    $region68: #{_rcnn_forward.3} parent=5 // pred_fallthru
      _
  $region6: #{_rcnn_forward.3} parent=0 // loop_footer
    %s17 = sadd.s32 1, %s13
  $region7: #{_rcnn_forward.3} parent=0 // loop_footer_branch
    %12 = sbr.rel target = $region3
  $region8: #{_rcnn_forward.3} parent=0 // loop_exit
    _

</llo_original>
